<compile_context>
chip_gen: v5e
topology: v5e:2x2
jax: 0.10.0
libtpu: 0.0.40
codegen_flags: <defaults>
</compile_context>

<pallas_src>
import math
import numpy as np
import jax
import jax.numpy as jnp
from jax.experimental import pallas as pl
from jax.experimental.pallas import tpu as pltpu

HID = 121            # hidden_size
MIX = 20             # n_output_mixture
INP = 3              # LSTM input_size
HP = 128             # lane-padded hidden size
GP = 4 * HP          # concatenated (i, f, g, o) gate width = 512
HEADS = 1 + 6 * MIX  # packed head columns: [e | pi | mu1 | mu2 | s1 | s2 | corr] = 121
HEADS_P = 128        # lane-padded packed head width


# ----------------------------- fused kernel ---------------------------------

def fused_mdn_lstm_kernel(x_ref, wih_ref, whh_ref, b_ref, wh_ref, bh_ref,
                          h0_ref, c0_ref,
                          heads_ref, hT_ref, cT_ref):
    """LSTM recurrence + fused MDN heads.

    x_ref   : (T, B, INP) f32      wih_ref : (INP, 512) f32    whh_ref : (128, 512) bf16
    b_ref   : (1, 512)  f32        wh_ref  : (128, 128) bf16   bh_ref  : (1, 128) f32
    h0/c0   : (B, 128)  f32        heads   : (T*B, 128) f32    hT/cT   : (B, 128) f32
    """
    T, B, _ = x_ref.shape

    x = x_ref[...]                              # (T, B, 3)
    wih = wih_ref[...]                          # (3, 512)
    b = b_ref[...]                              # (1, 512)
    whh = whh_ref[...]                          # (128, 512) bf16, loop-invariant

    h = h0_ref[...]                             # (B, 128) f32, padded lanes are zero
    c = c0_ref[...]

    hs_list = []
    for t in range(T):                          # static unroll; T is small
        # TODO(synk): for large T switch to lax.fori_loop(unroll=4/8) with a VMEM xproj scratch.
        xt = x[t]                               # (B, 3)
        # input projection (+ folded biases) as VPU broadcast FMAs — no K=3 MXU pass
        xp = (b
              + xt[:, 0:1] * wih[0:1, :]
              + xt[:, 1:2] * wih[1:2, :]
              + xt[:, 2:3] * wih[2:3, :])       # (B, 512)
        gates = jnp.dot(h.astype(jnp.bfloat16), whh,
                        preferred_element_type=jnp.float32) + xp
        i_g = jax.nn.sigmoid(gates[:, 0 * HP:1 * HP])
        f_g = jax.nn.sigmoid(gates[:, 1 * HP:2 * HP])
        g_g = jnp.tanh(gates[:, 2 * HP:3 * HP])
        o_g = jax.nn.sigmoid(gates[:, 3 * HP:4 * HP])
        c = f_g * c + i_g * g_g                 # padded lanes stay exactly zero
        h = o_g * jnp.tanh(c)
        hs_list.append(h)

    hT_ref[...] = h
    cT_ref[...] = c

    # ---- all 7 heads as one lane-dense (T*B,128) @ (128,128) bf16 matmul ----
    hs = jnp.concatenate(hs_list, axis=0)       # (T*B, 128), t-major, kept in vregs
    pre = (jnp.dot(hs.astype(jnp.bfloat16), wh_ref[...],
                   preferred_element_type=jnp.float32)
           + bh_ref[...])                       # (T*B, 128) f32

    # lane-masked activations (no sub-128 slices / concatenate)
    col = jax.lax.broadcasted_iota(jnp.int32, pre.shape, 1)
    e_mask    = col == 0
    pi_mask   = (col >= 1) & (col < 1 + MIX)
    sig_mask  = (col >= 1 + 3 * MIX) & (col < 1 + 5 * MIX)
    corr_mask = col >= 1 + 5 * MIX              # includes zero-padding cols (tanh(0)=0)

    # masked softmax over the pi columns
    pre_pi = jnp.where(pi_mask, pre, jnp.float32(-1e30))
    mx = jnp.max(pre_pi, axis=-1, keepdims=True)
    p = jnp.exp(pre_pi - mx)                    # exp underflows to 0 outside pi cols
    denom = jnp.sum(p, axis=-1, keepdims=True)
    pi_vals = p * pl.reciprocal(denom, approx=True)

    packed = pre                                # mu1 | mu2 columns stay linear
    packed = jnp.where(e_mask, jax.nn.sigmoid(pre), packed)
    packed = jnp.where(pi_mask, pi_vals, packed)
    packed = jnp.where(sig_mask, jnp.exp(pre), packed)
    packed = jnp.where(corr_mask, jnp.tanh(pre), packed)
    heads_ref[...] = packed                     # single unmasked lane-dense store


# ----------------------------- host-side param packing ----------------------

def _pad_cols(a, target):
    return jnp.pad(a, [(0, 0)] * (a.ndim - 1) + [(0, target - a.shape[-1])])


def prepare_params(p):
    """Concatenate/zero-pad raw parameters into lane-dense kernel operands."""
    # LSTM gate weights (i, f, g, o), each H-column-block padded to 128.
    wih = jnp.concatenate([_pad_cols(p['wih'][k], HP) for k in range(4)], axis=-1)   # (3, 512) f32
    whh = jnp.concatenate(
        [jnp.pad(p['whh'][k], ((0, HP - HID), (0, HP - HID))) for k in range(4)],
        axis=-1).astype(jnp.bfloat16)                                                # (128, 512) bf16
    b = jnp.concatenate([_pad_cols(p['b'][k], HP) for k in range(4)], axis=-1)       # (1, 512) f32
    # MDN heads packed: [e | pi | mu1 | mu2 | sigma1 | sigma2 | corr], padded to (128, 128).
    wh = jnp.concatenate([p['we']] + [p['wh'][k] for k in range(6)], axis=-1)        # (121, 121)
    wh = jnp.pad(wh, ((0, HP - HID), (0, HEADS_P - HEADS))).astype(jnp.bfloat16)     # (128, 128) bf16
    bh = _pad_cols(jnp.concatenate([p['be']] + [p['bh'][k] for k in range(6)],
                                   axis=-1), HEADS_P)                                # (1, 128) f32
    return {'wih': wih, 'whh': whh, 'b': b, 'wh': wh, 'bh': bh}


# ----------------------------- wrapper ---------------------------------------

def model_forward(x, hidden, prepared):
    h0, c0 = hidden                          # each (B, HID)
    B, T, _ = x.shape
    x_tm = jnp.transpose(x, (1, 0, 2))       # time-major (T, B, INP): cheap leading-dim slices
    h0p = _pad_cols(h0, HP)
    c0p = _pad_cols(c0, HP)

    vmem = pl.BlockSpec(memory_space=pltpu.MemorySpace.VMEM)
    heads, hT, cT = pl.pallas_call(
        fused_mdn_lstm_kernel,
        out_shape=(jax.ShapeDtypeStruct((T * B, HEADS_P), jnp.float32),
                   jax.ShapeDtypeStruct((B, HP), jnp.float32),
                   jax.ShapeDtypeStruct((B, HP), jnp.float32)),
        in_specs=[vmem] * 8,
        out_specs=(vmem, vmem, vmem),
    )(x_tm, prepared['wih'], prepared['whh'], prepared['b'],
      prepared['wh'], prepared['bh'], h0p, c0p)

    heads = heads.reshape(T, B, HEADS_P).transpose(1, 0, 2)   # (B, T, 128), tiny host-side op
    e    = heads[:, :, 0:1]
    pi   = heads[:, :, 1:1 + MIX]
    mu1  = heads[:, :, 21:41]
    mu2  = heads[:, :, 41:61]
    s1   = heads[:, :, 61:81]
    s2   = heads[:, :, 81:101]
    corr = heads[:, :, 101:121]
    hidden_out = (hT[None, :, :HID], cT[None, :, :HID])   # (1, B, H), PyTorch convention
    return e, pi, mu1, mu2, s1, s2, corr, hidden_out


# ----------------------------- reference (pure JAX, raw params) --------------

def reference_forward(x, hidden, p):
    h, c = hidden
    outs = []
    for t in range(x.shape[1]):
        xt = x[:, t, :]
        g = lambda k: xt @ p['wih'][k] + h @ p['whh'][k] + p['b'][k]
        i_g = jax.nn.sigmoid(g(0)); f_g = jax.nn.sigmoid(g(1))
        g_g = jnp.tanh(g(2));       o_g = jax.nn.sigmoid(g(3))
        c = f_g * c + i_g * g_g
        h = o_g * jnp.tanh(c)
        outs.append(h)
    out = jnp.stack(outs, axis=1)
    lin = lambda w, b: jnp.einsum('bth,hm->btm', out, w) + b
    e    = jax.nn.sigmoid(lin(p['we'], p['be']))
    pi   = jax.nn.softmax(lin(p['wh'][0], p['bh'][0]), axis=-1)
    mu1  = lin(p['wh'][1], p['bh'][1])
    mu2  = lin(p['wh'][2], p['bh'][2])
    s1   = jnp.exp(lin(p['wh'][3], p['bh'][3]))
    s2   = jnp.exp(lin(p['wh'][4], p['bh'][4]))
    corr = jnp.tanh(lin(p['wh'][5], p['bh'][5]))
    return e, pi, mu1, mu2, s1, s2, corr, (h[None], c[None])


# ----------------------------- main ------------------------------------------

if __name__ == "__main__":
    B, T = 2, 8
    key = jax.random.PRNGKey(0)
    ks = jax.random.split(key, 10)
    s = 1.0 / math.sqrt(HID)   # PyTorch default uniform(-1/sqrt(H), 1/sqrt(H))

    params = {
        # LSTM weights, gate order (i, f, g, o); biases b_ih + b_hh folded together.
        'wih': jax.random.uniform(ks[0], (4, INP, HID), jnp.float32, -s, s),
        'whh': jax.random.uniform(ks[1], (4, HID, HID), jnp.float32, -s, s),
        'b':   jax.random.uniform(ks[2], (4, 1, HID), jnp.float32, -s, s)
             + jax.random.uniform(ks[3], (4, 1, HID), jnp.float32, -s, s),
        # Heads: e (H->1), then stacked (pi, mu1, mu2, sigma1, sigma2, corr) (H->M).
        'we':  jax.random.uniform(ks[4], (HID, 1), jnp.float32, -s, s),
        'be':  jax.random.uniform(ks[5], (1, 1), jnp.float32, -s, s),
        'wh':  jax.random.uniform(ks[6], (6, HID, MIX), jnp.float32, -s, s),
        'bh':  jax.random.uniform(ks[7], (6, 1, MIX), jnp.float32, -s, s),
    }

    x = jax.random.normal(ks[8], (B, T, INP), jnp.float32)
    h0 = jnp.zeros((B, HID), jnp.float32)
    c0 = jnp.zeros((B, HID), jnp.float32)

    prepared = prepare_params(params)
    got = model_forward(x, (h0, c0), prepared)
    jax.block_until_ready(got)

    want = reference_forward(x, (h0, c0), params)
    names = ["e", "pi", "mu1", "mu2", "sigma1", "sigma2", "corr"]
    for name, g, w in zip(names, got[:7], want[:7]):
        np.testing.assert_allclose(np.asarray(g), np.asarray(w),
                                   rtol=1e-2, atol=1e-2, err_msg=name)
    np.testing.assert_allclose(np.asarray(got[7][0]), np.asarray(want[7][0]),
                               rtol=1e-2, atol=1e-2, err_msg="h_n")
    np.testing.assert_allclose(np.asarray(got[7][1]), np.asarray(want[7][1]),
                               rtol=1e-2, atol=1e-2, err_msg="c_n")

    print("KERNEL_OK")
</pallas_src>

<mosaic_0001>
module attributes {stable_mosaic.version = 11 : i64} {
  func.func @fused_mdn_lstm_kernel(%arg0: memref<8x2x3xf32, #tpu.memory_space<vmem>>, %arg1: memref<3x512xf32, #tpu.memory_space<vmem>>, %arg2: memref<128x512xbf16, #tpu.memory_space<vmem>>, %arg3: memref<1x512xf32, #tpu.memory_space<vmem>>, %arg4: memref<128x128xbf16, #tpu.memory_space<vmem>>, %arg5: memref<1x128xf32, #tpu.memory_space<vmem>>, %arg6: memref<2x128xf32, #tpu.memory_space<vmem>>, %arg7: memref<2x128xf32, #tpu.memory_space<vmem>>, %arg8: memref<16x128xf32, #tpu.memory_space<vmem>>, %arg9: memref<2x128xf32, #tpu.memory_space<vmem>>, %arg10: memref<2x128xf32, #tpu.memory_space<vmem>>) attributes {dimension_semantics = [], scalar_prefetch = 0 : i64, scratch_operands = 0 : i64, tpu.core_type = #tpu.core_type<tc>} {
    %c0 = arith.constant 0 : index
    %c0_0 = arith.constant 0 : index
    %c0_1 = arith.constant 0 : index
    %0 = vector.load %arg0[%c0, %c0_0, %c0_1] : memref<8x2x3xf32, #tpu.memory_space<vmem>>, vector<8x2x3xf32>
    %c0_2 = arith.constant 0 : index
    %c0_3 = arith.constant 0 : index
    %1 = vector.load %arg1[%c0_2, %c0_3] : memref<3x512xf32, #tpu.memory_space<vmem>>, vector<3x512xf32>
    %c0_4 = arith.constant 0 : index
    %c0_5 = arith.constant 0 : index
    %2 = vector.load %arg3[%c0_4, %c0_5] : memref<1x512xf32, #tpu.memory_space<vmem>>, vector<1x512xf32>
    %c0_6 = arith.constant 0 : index
    %c0_7 = arith.constant 0 : index
    %3 = vector.load %arg2[%c0_6, %c0_7] : memref<128x512xbf16, #tpu.memory_space<vmem>>, vector<128x512xbf16>
    %c0_8 = arith.constant 0 : index
    %c0_9 = arith.constant 0 : index
    %4 = vector.load %arg6[%c0_8, %c0_9] : memref<2x128xf32, #tpu.memory_space<vmem>>, vector<2x128xf32>
    %c0_10 = arith.constant 0 : index
    %c0_11 = arith.constant 0 : index
    %5 = vector.load %arg7[%c0_10, %c0_11] : memref<2x128xf32, #tpu.memory_space<vmem>>, vector<2x128xf32>
    %6 = vector.extract_strided_slice %0 {offsets = [0, 0, 0], sizes = [1, 2, 3], strides = [1, 1, 1]} : vector<8x2x3xf32> to vector<1x2x3xf32>
    %7 = vector.shape_cast %6 : vector<1x2x3xf32> to vector<2x3xf32>
    %8 = vector.extract_strided_slice %7 {offsets = [0, 0], sizes = [2, 1], strides = [1, 1]} : vector<2x3xf32> to vector<2x1xf32>
    %9 = vector.extract_strided_slice %1 {offsets = [0, 0], sizes = [1, 512], strides = [1, 1]} : vector<3x512xf32> to vector<1x512xf32>
    %10 = vector.broadcast %8 : vector<2x1xf32> to vector<2x512xf32>
    %11 = vector.broadcast %9 : vector<1x512xf32> to vector<2x512xf32>
    %12 = arith.mulf %10, %11 : vector<2x512xf32>
    %13 = vector.broadcast %2 : vector<1x512xf32> to vector<2x512xf32>
    %14 = arith.addf %13, %12 : vector<2x512xf32>
    %15 = vector.extract_strided_slice %7 {offsets = [0, 1], sizes = [2, 1], strides = [1, 1]} : vector<2x3xf32> to vector<2x1xf32>
    %16 = vector.extract_strided_slice %1 {offsets = [1, 0], sizes = [1, 512], strides = [1, 1]} : vector<3x512xf32> to vector<1x512xf32>
    %17 = vector.broadcast %15 : vector<2x1xf32> to vector<2x512xf32>
    %18 = vector.broadcast %16 : vector<1x512xf32> to vector<2x512xf32>
    %19 = arith.mulf %17, %18 : vector<2x512xf32>
    %20 = arith.addf %14, %19 : vector<2x512xf32>
    %21 = vector.extract_strided_slice %7 {offsets = [0, 2], sizes = [2, 1], strides = [1, 1]} : vector<2x3xf32> to vector<2x1xf32>
    %22 = vector.extract_strided_slice %1 {offsets = [2, 0], sizes = [1, 512], strides = [1, 1]} : vector<3x512xf32> to vector<1x512xf32>
    %23 = vector.broadcast %21 : vector<2x1xf32> to vector<2x512xf32>
    %24 = vector.broadcast %22 : vector<1x512xf32> to vector<2x512xf32>
    %25 = arith.mulf %23, %24 : vector<2x512xf32>
    %26 = arith.addf %20, %25 : vector<2x512xf32>
    %27 = arith.truncf %4 : vector<2x128xf32> to vector<2x128xbf16>
    %cst = arith.constant dense<0.000000e+00> : vector<2x512xf32>
    %28 = tpu.matmul %27, %3, %cst {dimension_numbers = #tpu.dot_dimension_numbers<[1], [0], [0], [1], [0, 0, 1, 1], [], []>} : vector<2x128xbf16>, vector<128x512xbf16>, vector<2x512xf32> -> vector<2x512xf32>
    %29 = arith.addf %28, %26 : vector<2x512xf32>
    %30 = vector.extract_strided_slice %29 {offsets = [0, 0], sizes = [2, 128], strides = [1, 1]} : vector<2x512xf32> to vector<2x128xf32>
    %31 = arith.negf %30 : vector<2x128xf32>
    %32 = math.exp %31 : vector<2x128xf32>
    %cst_12 = arith.constant 1.000000e+00 : f32
    %33 = vector.broadcast %cst_12 : f32 to vector<2x128xf32>
    %34 = arith.addf %33, %32 : vector<2x128xf32>
    %35 = arith.divf %33, %34 : vector<2x128xf32>
    %36 = vector.extract_strided_slice %29 {offsets = [0, 128], sizes = [2, 128], strides = [1, 1]} : vector<2x512xf32> to vector<2x128xf32>
    %37 = arith.negf %36 : vector<2x128xf32>
    %38 = math.exp %37 : vector<2x128xf32>
    %cst_13 = arith.constant 1.000000e+00 : f32
    %39 = vector.broadcast %cst_13 : f32 to vector<2x128xf32>
    %40 = arith.addf %39, %38 : vector<2x128xf32>
    %41 = arith.divf %39, %40 : vector<2x128xf32>
    %42 = vector.extract_strided_slice %29 {offsets = [0, 256], sizes = [2, 128], strides = [1, 1]} : vector<2x512xf32> to vector<2x128xf32>
    %43 = math.tanh %42 : vector<2x128xf32>
    %44 = vector.extract_strided_slice %29 {offsets = [0, 384], sizes = [2, 128], strides = [1, 1]} : vector<2x512xf32> to vector<2x128xf32>
    %45 = arith.negf %44 : vector<2x128xf32>
    %46 = math.exp %45 : vector<2x128xf32>
    %cst_14 = arith.constant 1.000000e+00 : f32
    %47 = vector.broadcast %cst_14 : f32 to vector<2x128xf32>
    %48 = arith.addf %47, %46 : vector<2x128xf32>
    %49 = arith.divf %47, %48 : vector<2x128xf32>
    %50 = arith.mulf %41, %5 : vector<2x128xf32>
    %51 = arith.mulf %35, %43 : vector<2x128xf32>
    %52 = arith.addf %50, %51 : vector<2x128xf32>
    %53 = math.tanh %52 : vector<2x128xf32>
    %54 = arith.mulf %49, %53 : vector<2x128xf32>
    %55 = vector.extract_strided_slice %0 {offsets = [1, 0, 0], sizes = [1, 2, 3], strides = [1, 1, 1]} : vector<8x2x3xf32> to vector<1x2x3xf32>
    %56 = vector.shape_cast %55 : vector<1x2x3xf32> to vector<2x3xf32>
    %57 = vector.extract_strided_slice %56 {offsets = [0, 0], sizes = [2, 1], strides = [1, 1]} : vector<2x3xf32> to vector<2x1xf32>
    %58 = vector.extract_strided_slice %1 {offsets = [0, 0], sizes = [1, 512], strides = [1, 1]} : vector<3x512xf32> to vector<1x512xf32>
    %59 = vector.broadcast %57 : vector<2x1xf32> to vector<2x512xf32>
    %60 = vector.broadcast %58 : vector<1x512xf32> to vector<2x512xf32>
    %61 = arith.mulf %59, %60 : vector<2x512xf32>
    %62 = vector.broadcast %2 : vector<1x512xf32> to vector<2x512xf32>
    %63 = arith.addf %62, %61 : vector<2x512xf32>
    %64 = vector.extract_strided_slice %56 {offsets = [0, 1], sizes = [2, 1], strides = [1, 1]} : vector<2x3xf32> to vector<2x1xf32>
    %65 = vector.extract_strided_slice %1 {offsets = [1, 0], sizes = [1, 512], strides = [1, 1]} : vector<3x512xf32> to vector<1x512xf32>
    %66 = vector.broadcast %64 : vector<2x1xf32> to vector<2x512xf32>
    %67 = vector.broadcast %65 : vector<1x512xf32> to vector<2x512xf32>
    %68 = arith.mulf %66, %67 : vector<2x512xf32>
    %69 = arith.addf %63, %68 : vector<2x512xf32>
    %70 = vector.extract_strided_slice %56 {offsets = [0, 2], sizes = [2, 1], strides = [1, 1]} : vector<2x3xf32> to vector<2x1xf32>
    %71 = vector.extract_strided_slice %1 {offsets = [2, 0], sizes = [1, 512], strides = [1, 1]} : vector<3x512xf32> to vector<1x512xf32>
    %72 = vector.broadcast %70 : vector<2x1xf32> to vector<2x512xf32>
    %73 = vector.broadcast %71 : vector<1x512xf32> to vector<2x512xf32>
    %74 = arith.mulf %72, %73 : vector<2x512xf32>
    %75 = arith.addf %69, %74 : vector<2x512xf32>
    %76 = arith.truncf %54 : vector<2x128xf32> to vector<2x128xbf16>
    %cst_15 = arith.constant dense<0.000000e+00> : vector<2x512xf32>
    %77 = tpu.matmul %76, %3, %cst_15 {dimension_numbers = #tpu.dot_dimension_numbers<[1], [0], [0], [1], [0, 0, 1, 1], [], []>} : vector<2x128xbf16>, vector<128x512xbf16>, vector<2x512xf32> -> vector<2x512xf32>
    %78 = arith.addf %77, %75 : vector<2x512xf32>
    %79 = vector.extract_strided_slice %78 {offsets = [0, 0], sizes = [2, 128], strides = [1, 1]} : vector<2x512xf32> to vector<2x128xf32>
    %80 = arith.negf %79 : vector<2x128xf32>
    %81 = math.exp %80 : vector<2x128xf32>
    %cst_16 = arith.constant 1.000000e+00 : f32
    %82 = vector.broadcast %cst_16 : f32 to vector<2x128xf32>
    %83 = arith.addf %82, %81 : vector<2x128xf32>
    %84 = arith.divf %82, %83 : vector<2x128xf32>
    %85 = vector.extract_strided_slice %78 {offsets = [0, 128], sizes = [2, 128], strides = [1, 1]} : vector<2x512xf32> to vector<2x128xf32>
    %86 = arith.negf %85 : vector<2x128xf32>
    %87 = math.exp %86 : vector<2x128xf32>
    %cst_17 = arith.constant 1.000000e+00 : f32
    %88 = vector.broadcast %cst_17 : f32 to vector<2x128xf32>
    %89 = arith.addf %88, %87 : vector<2x128xf32>
    %90 = arith.divf %88, %89 : vector<2x128xf32>
    %91 = vector.extract_strided_slice %78 {offsets = [0, 256], sizes = [2, 128], strides = [1, 1]} : vector<2x512xf32> to vector<2x128xf32>
    %92 = math.tanh %91 : vector<2x128xf32>
    %93 = vector.extract_strided_slice %78 {offsets = [0, 384], sizes = [2, 128], strides = [1, 1]} : vector<2x512xf32> to vector<2x128xf32>
    %94 = arith.negf %93 : vector<2x128xf32>
    %95 = math.exp %94 : vector<2x128xf32>
    %cst_18 = arith.constant 1.000000e+00 : f32
    %96 = vector.broadcast %cst_18 : f32 to vector<2x128xf32>
    %97 = arith.addf %96, %95 : vector<2x128xf32>
    %98 = arith.divf %96, %97 : vector<2x128xf32>
    %99 = arith.mulf %90, %52 : vector<2x128xf32>
    %100 = arith.mulf %84, %92 : vector<2x128xf32>
    %101 = arith.addf %99, %100 : vector<2x128xf32>
    %102 = math.tanh %101 : vector<2x128xf32>
    %103 = arith.mulf %98, %102 : vector<2x128xf32>
    %104 = vector.extract_strided_slice %0 {offsets = [2, 0, 0], sizes = [1, 2, 3], strides = [1, 1, 1]} : vector<8x2x3xf32> to vector<1x2x3xf32>
    %105 = vector.shape_cast %104 : vector<1x2x3xf32> to vector<2x3xf32>
    %106 = vector.extract_strided_slice %105 {offsets = [0, 0], sizes = [2, 1], strides = [1, 1]} : vector<2x3xf32> to vector<2x1xf32>
    %107 = vector.extract_strided_slice %1 {offsets = [0, 0], sizes = [1, 512], strides = [1, 1]} : vector<3x512xf32> to vector<1x512xf32>
    %108 = vector.broadcast %106 : vector<2x1xf32> to vector<2x512xf32>
    %109 = vector.broadcast %107 : vector<1x512xf32> to vector<2x512xf32>
    %110 = arith.mulf %108, %109 : vector<2x512xf32>
    %111 = vector.broadcast %2 : vector<1x512xf32> to vector<2x512xf32>
    %112 = arith.addf %111, %110 : vector<2x512xf32>
    %113 = vector.extract_strided_slice %105 {offsets = [0, 1], sizes = [2, 1], strides = [1, 1]} : vector<2x3xf32> to vector<2x1xf32>
    %114 = vector.extract_strided_slice %1 {offsets = [1, 0], sizes = [1, 512], strides = [1, 1]} : vector<3x512xf32> to vector<1x512xf32>
    %115 = vector.broadcast %113 : vector<2x1xf32> to vector<2x512xf32>
    %116 = vector.broadcast %114 : vector<1x512xf32> to vector<2x512xf32>
    %117 = arith.mulf %115, %116 : vector<2x512xf32>
    %118 = arith.addf %112, %117 : vector<2x512xf32>
    %119 = vector.extract_strided_slice %105 {offsets = [0, 2], sizes = [2, 1], strides = [1, 1]} : vector<2x3xf32> to vector<2x1xf32>
    %120 = vector.extract_strided_slice %1 {offsets = [2, 0], sizes = [1, 512], strides = [1, 1]} : vector<3x512xf32> to vector<1x512xf32>
    %121 = vector.broadcast %119 : vector<2x1xf32> to vector<2x512xf32>
    %122 = vector.broadcast %120 : vector<1x512xf32> to vector<2x512xf32>
    %123 = arith.mulf %121, %122 : vector<2x512xf32>
    %124 = arith.addf %118, %123 : vector<2x512xf32>
    %125 = arith.truncf %103 : vector<2x128xf32> to vector<2x128xbf16>
    %cst_19 = arith.constant dense<0.000000e+00> : vector<2x512xf32>
    %126 = tpu.matmul %125, %3, %cst_19 {dimension_numbers = #tpu.dot_dimension_numbers<[1], [0], [0], [1], [0, 0, 1, 1], [], []>} : vector<2x128xbf16>, vector<128x512xbf16>, vector<2x512xf32> -> vector<2x512xf32>
    %127 = arith.addf %126, %124 : vector<2x512xf32>
    %128 = vector.extract_strided_slice %127 {offsets = [0, 0], sizes = [2, 128], strides = [1, 1]} : vector<2x512xf32> to vector<2x128xf32>
    %129 = arith.negf %128 : vector<2x128xf32>
    %130 = math.exp %129 : vector<2x128xf32>
    %cst_20 = arith.constant 1.000000e+00 : f32
    %131 = vector.broadcast %cst_20 : f32 to vector<2x128xf32>
    %132 = arith.addf %131, %130 : vector<2x128xf32>
    %133 = arith.divf %131, %132 : vector<2x128xf32>
    %134 = vector.extract_strided_slice %127 {offsets = [0, 128], sizes = [2, 128], strides = [1, 1]} : vector<2x512xf32> to vector<2x128xf32>
    %135 = arith.negf %134 : vector<2x128xf32>
    %136 = math.exp %135 : vector<2x128xf32>
    %cst_21 = arith.constant 1.000000e+00 : f32
    %137 = vector.broadcast %cst_21 : f32 to vector<2x128xf32>
    %138 = arith.addf %137, %136 : vector<2x128xf32>
    %139 = arith.divf %137, %138 : vector<2x128xf32>
    %140 = vector.extract_strided_slice %127 {offsets = [0, 256], sizes = [2, 128], strides = [1, 1]} : vector<2x512xf32> to vector<2x128xf32>
    %141 = math.tanh %140 : vector<2x128xf32>
    %142 = vector.extract_strided_slice %127 {offsets = [0, 384], sizes = [2, 128], strides = [1, 1]} : vector<2x512xf32> to vector<2x128xf32>
    %143 = arith.negf %142 : vector<2x128xf32>
    %144 = math.exp %143 : vector<2x128xf32>
    %cst_22 = arith.constant 1.000000e+00 : f32
    %145 = vector.broadcast %cst_22 : f32 to vector<2x128xf32>
    %146 = arith.addf %145, %144 : vector<2x128xf32>
    %147 = arith.divf %145, %146 : vector<2x128xf32>
    %148 = arith.mulf %139, %101 : vector<2x128xf32>
    %149 = arith.mulf %133, %141 : vector<2x128xf32>
    %150 = arith.addf %148, %149 : vector<2x128xf32>
    %151 = math.tanh %150 : vector<2x128xf32>
    %152 = arith.mulf %147, %151 : vector<2x128xf32>
    %153 = vector.extract_strided_slice %0 {offsets = [3, 0, 0], sizes = [1, 2, 3], strides = [1, 1, 1]} : vector<8x2x3xf32> to vector<1x2x3xf32>
    %154 = vector.shape_cast %153 : vector<1x2x3xf32> to vector<2x3xf32>
    %155 = vector.extract_strided_slice %154 {offsets = [0, 0], sizes = [2, 1], strides = [1, 1]} : vector<2x3xf32> to vector<2x1xf32>
    %156 = vector.extract_strided_slice %1 {offsets = [0, 0], sizes = [1, 512], strides = [1, 1]} : vector<3x512xf32> to vector<1x512xf32>
    %157 = vector.broadcast %155 : vector<2x1xf32> to vector<2x512xf32>
    %158 = vector.broadcast %156 : vector<1x512xf32> to vector<2x512xf32>
    %159 = arith.mulf %157, %158 : vector<2x512xf32>
    %160 = vector.broadcast %2 : vector<1x512xf32> to vector<2x512xf32>
    %161 = arith.addf %160, %159 : vector<2x512xf32>
    %162 = vector.extract_strided_slice %154 {offsets = [0, 1], sizes = [2, 1], strides = [1, 1]} : vector<2x3xf32> to vector<2x1xf32>
    %163 = vector.extract_strided_slice %1 {offsets = [1, 0], sizes = [1, 512], strides = [1, 1]} : vector<3x512xf32> to vector<1x512xf32>
    %164 = vector.broadcast %162 : vector<2x1xf32> to vector<2x512xf32>
    %165 = vector.broadcast %163 : vector<1x512xf32> to vector<2x512xf32>
    %166 = arith.mulf %164, %165 : vector<2x512xf32>
    %167 = arith.addf %161, %166 : vector<2x512xf32>
    %168 = vector.extract_strided_slice %154 {offsets = [0, 2], sizes = [2, 1], strides = [1, 1]} : vector<2x3xf32> to vector<2x1xf32>
    %169 = vector.extract_strided_slice %1 {offsets = [2, 0], sizes = [1, 512], strides = [1, 1]} : vector<3x512xf32> to vector<1x512xf32>
    %170 = vector.broadcast %168 : vector<2x1xf32> to vector<2x512xf32>
    %171 = vector.broadcast %169 : vector<1x512xf32> to vector<2x512xf32>
    %172 = arith.mulf %170, %171 : vector<2x512xf32>
    %173 = arith.addf %167, %172 : vector<2x512xf32>
    %174 = arith.truncf %152 : vector<2x128xf32> to vector<2x128xbf16>
    %cst_23 = arith.constant dense<0.000000e+00> : vector<2x512xf32>
    %175 = tpu.matmul %174, %3, %cst_23 {dimension_numbers = #tpu.dot_dimension_numbers<[1], [0], [0], [1], [0, 0, 1, 1], [], []>} : vector<2x128xbf16>, vector<128x512xbf16>, vector<2x512xf32> -> vector<2x512xf32>
    %176 = arith.addf %175, %173 : vector<2x512xf32>
    %177 = vector.extract_strided_slice %176 {offsets = [0, 0], sizes = [2, 128], strides = [1, 1]} : vector<2x512xf32> to vector<2x128xf32>
    %178 = arith.negf %177 : vector<2x128xf32>
    %179 = math.exp %178 : vector<2x128xf32>
    %cst_24 = arith.constant 1.000000e+00 : f32
    %180 = vector.broadcast %cst_24 : f32 to vector<2x128xf32>
    %181 = arith.addf %180, %179 : vector<2x128xf32>
    %182 = arith.divf %180, %181 : vector<2x128xf32>
    %183 = vector.extract_strided_slice %176 {offsets = [0, 128], sizes = [2, 128], strides = [1, 1]} : vector<2x512xf32> to vector<2x128xf32>
    %184 = arith.negf %183 : vector<2x128xf32>
    %185 = math.exp %184 : vector<2x128xf32>
    %cst_25 = arith.constant 1.000000e+00 : f32
    %186 = vector.broadcast %cst_25 : f32 to vector<2x128xf32>
    %187 = arith.addf %186, %185 : vector<2x128xf32>
    %188 = arith.divf %186, %187 : vector<2x128xf32>
    %189 = vector.extract_strided_slice %176 {offsets = [0, 256], sizes = [2, 128], strides = [1, 1]} : vector<2x512xf32> to vector<2x128xf32>
    %190 = math.tanh %189 : vector<2x128xf32>
    %191 = vector.extract_strided_slice %176 {offsets = [0, 384], sizes = [2, 128], strides = [1, 1]} : vector<2x512xf32> to vector<2x128xf32>
    %192 = arith.negf %191 : vector<2x128xf32>
    %193 = math.exp %192 : vector<2x128xf32>
    %cst_26 = arith.constant 1.000000e+00 : f32
    %194 = vector.broadcast %cst_26 : f32 to vector<2x128xf32>
    %195 = arith.addf %194, %193 : vector<2x128xf32>
    %196 = arith.divf %194, %195 : vector<2x128xf32>
    %197 = arith.mulf %188, %150 : vector<2x128xf32>
    %198 = arith.mulf %182, %190 : vector<2x128xf32>
    %199 = arith.addf %197, %198 : vector<2x128xf32>
    %200 = math.tanh %199 : vector<2x128xf32>
    %201 = arith.mulf %196, %200 : vector<2x128xf32>
    %202 = vector.extract_strided_slice %0 {offsets = [4, 0, 0], sizes = [1, 2, 3], strides = [1, 1, 1]} : vector<8x2x3xf32> to vector<1x2x3xf32>
    %203 = vector.shape_cast %202 : vector<1x2x3xf32> to vector<2x3xf32>
    %204 = vector.extract_strided_slice %203 {offsets = [0, 0], sizes = [2, 1], strides = [1, 1]} : vector<2x3xf32> to vector<2x1xf32>
    %205 = vector.extract_strided_slice %1 {offsets = [0, 0], sizes = [1, 512], strides = [1, 1]} : vector<3x512xf32> to vector<1x512xf32>
    %206 = vector.broadcast %204 : vector<2x1xf32> to vector<2x512xf32>
    %207 = vector.broadcast %205 : vector<1x512xf32> to vector<2x512xf32>
    %208 = arith.mulf %206, %207 : vector<2x512xf32>
    %209 = vector.broadcast %2 : vector<1x512xf32> to vector<2x512xf32>
    %210 = arith.addf %209, %208 : vector<2x512xf32>
    %211 = vector.extract_strided_slice %203 {offsets = [0, 1], sizes = [2, 1], strides = [1, 1]} : vector<2x3xf32> to vector<2x1xf32>
    %212 = vector.extract_strided_slice %1 {offsets = [1, 0], sizes = [1, 512], strides = [1, 1]} : vector<3x512xf32> to vector<1x512xf32>
    %213 = vector.broadcast %211 : vector<2x1xf32> to vector<2x512xf32>
    %214 = vector.broadcast %212 : vector<1x512xf32> to vector<2x512xf32>
    %215 = arith.mulf %213, %214 : vector<2x512xf32>
    %216 = arith.addf %210, %215 : vector<2x512xf32>
    %217 = vector.extract_strided_slice %203 {offsets = [0, 2], sizes = [2, 1], strides = [1, 1]} : vector<2x3xf32> to vector<2x1xf32>
    %218 = vector.extract_strided_slice %1 {offsets = [2, 0], sizes = [1, 512], strides = [1, 1]} : vector<3x512xf32> to vector<1x512xf32>
    %219 = vector.broadcast %217 : vector<2x1xf32> to vector<2x512xf32>
    %220 = vector.broadcast %218 : vector<1x512xf32> to vector<2x512xf32>
    %221 = arith.mulf %219, %220 : vector<2x512xf32>
    %222 = arith.addf %216, %221 : vector<2x512xf32>
    %223 = arith.truncf %201 : vector<2x128xf32> to vector<2x128xbf16>
    %cst_27 = arith.constant dense<0.000000e+00> : vector<2x512xf32>
    %224 = tpu.matmul %223, %3, %cst_27 {dimension_numbers = #tpu.dot_dimension_numbers<[1], [0], [0], [1], [0, 0, 1, 1], [], []>} : vector<2x128xbf16>, vector<128x512xbf16>, vector<2x512xf32> -> vector<2x512xf32>
    %225 = arith.addf %224, %222 : vector<2x512xf32>
    %226 = vector.extract_strided_slice %225 {offsets = [0, 0], sizes = [2, 128], strides = [1, 1]} : vector<2x512xf32> to vector<2x128xf32>
    %227 = arith.negf %226 : vector<2x128xf32>
    %228 = math.exp %227 : vector<2x128xf32>
    %cst_28 = arith.constant 1.000000e+00 : f32
    %229 = vector.broadcast %cst_28 : f32 to vector<2x128xf32>
    %230 = arith.addf %229, %228 : vector<2x128xf32>
    %231 = arith.divf %229, %230 : vector<2x128xf32>
    %232 = vector.extract_strided_slice %225 {offsets = [0, 128], sizes = [2, 128], strides = [1, 1]} : vector<2x512xf32> to vector<2x128xf32>
    %233 = arith.negf %232 : vector<2x128xf32>
    %234 = math.exp %233 : vector<2x128xf32>
    %cst_29 = arith.constant 1.000000e+00 : f32
    %235 = vector.broadcast %cst_29 : f32 to vector<2x128xf32>
    %236 = arith.addf %235, %234 : vector<2x128xf32>
    %237 = arith.divf %235, %236 : vector<2x128xf32>
    %238 = vector.extract_strided_slice %225 {offsets = [0, 256], sizes = [2, 128], strides = [1, 1]} : vector<2x512xf32> to vector<2x128xf32>
    %239 = math.tanh %238 : vector<2x128xf32>
    %240 = vector.extract_strided_slice %225 {offsets = [0, 384], sizes = [2, 128], strides = [1, 1]} : vector<2x512xf32> to vector<2x128xf32>
    %241 = arith.negf %240 : vector<2x128xf32>
    %242 = math.exp %241 : vector<2x128xf32>
    %cst_30 = arith.constant 1.000000e+00 : f32
    %243 = vector.broadcast %cst_30 : f32 to vector<2x128xf32>
    %244 = arith.addf %243, %242 : vector<2x128xf32>
    %245 = arith.divf %243, %244 : vector<2x128xf32>
    %246 = arith.mulf %237, %199 : vector<2x128xf32>
    %247 = arith.mulf %231, %239 : vector<2x128xf32>
    %248 = arith.addf %246, %247 : vector<2x128xf32>
    %249 = math.tanh %248 : vector<2x128xf32>
    %250 = arith.mulf %245, %249 : vector<2x128xf32>
    %251 = vector.extract_strided_slice %0 {offsets = [5, 0, 0], sizes = [1, 2, 3], strides = [1, 1, 1]} : vector<8x2x3xf32> to vector<1x2x3xf32>
    %252 = vector.shape_cast %251 : vector<1x2x3xf32> to vector<2x3xf32>
    %253 = vector.extract_strided_slice %252 {offsets = [0, 0], sizes = [2, 1], strides = [1, 1]} : vector<2x3xf32> to vector<2x1xf32>
    %254 = vector.extract_strided_slice %1 {offsets = [0, 0], sizes = [1, 512], strides = [1, 1]} : vector<3x512xf32> to vector<1x512xf32>
    %255 = vector.broadcast %253 : vector<2x1xf32> to vector<2x512xf32>
    %256 = vector.broadcast %254 : vector<1x512xf32> to vector<2x512xf32>
    %257 = arith.mulf %255, %256 : vector<2x512xf32>
    %258 = vector.broadcast %2 : vector<1x512xf32> to vector<2x512xf32>
    %259 = arith.addf %258, %257 : vector<2x512xf32>
    %260 = vector.extract_strided_slice %252 {offsets = [0, 1], sizes = [2, 1], strides = [1, 1]} : vector<2x3xf32> to vector<2x1xf32>
    %261 = vector.extract_strided_slice %1 {offsets = [1, 0], sizes = [1, 512], strides = [1, 1]} : vector<3x512xf32> to vector<1x512xf32>
    %262 = vector.broadcast %260 : vector<2x1xf32> to vector<2x512xf32>
    %263 = vector.broadcast %261 : vector<1x512xf32> to vector<2x512xf32>
    %264 = arith.mulf %262, %263 : vector<2x512xf32>
    %265 = arith.addf %259, %264 : vector<2x512xf32>
    %266 = vector.extract_strided_slice %252 {offsets = [0, 2], sizes = [2, 1], strides = [1, 1]} : vector<2x3xf32> to vector<2x1xf32>
    %267 = vector.extract_strided_slice %1 {offsets = [2, 0], sizes = [1, 512], strides = [1, 1]} : vector<3x512xf32> to vector<1x512xf32>
    %268 = vector.broadcast %266 : vector<2x1xf32> to vector<2x512xf32>
    %269 = vector.broadcast %267 : vector<1x512xf32> to vector<2x512xf32>
    %270 = arith.mulf %268, %269 : vector<2x512xf32>
    %271 = arith.addf %265, %270 : vector<2x512xf32>
    %272 = arith.truncf %250 : vector<2x128xf32> to vector<2x128xbf16>
    %cst_31 = arith.constant dense<0.000000e+00> : vector<2x512xf32>
    %273 = tpu.matmul %272, %3, %cst_31 {dimension_numbers = #tpu.dot_dimension_numbers<[1], [0], [0], [1], [0, 0, 1, 1], [], []>} : vector<2x128xbf16>, vector<128x512xbf16>, vector<2x512xf32> -> vector<2x512xf32>
    %274 = arith.addf %273, %271 : vector<2x512xf32>
    %275 = vector.extract_strided_slice %274 {offsets = [0, 0], sizes = [2, 128], strides = [1, 1]} : vector<2x512xf32> to vector<2x128xf32>
    %276 = arith.negf %275 : vector<2x128xf32>
    %277 = math.exp %276 : vector<2x128xf32>
    %cst_32 = arith.constant 1.000000e+00 : f32
    %278 = vector.broadcast %cst_32 : f32 to vector<2x128xf32>
    %279 = arith.addf %278, %277 : vector<2x128xf32>
    %280 = arith.divf %278, %279 : vector<2x128xf32>
    %281 = vector.extract_strided_slice %274 {offsets = [0, 128], sizes = [2, 128], strides = [1, 1]} : vector<2x512xf32> to vector<2x128xf32>
    %282 = arith.negf %281 : vector<2x128xf32>
    %283 = math.exp %282 : vector<2x128xf32>
    %cst_33 = arith.constant 1.000000e+00 : f32
    %284 = vector.broadcast %cst_33 : f32 to vector<2x128xf32>
    %285 = arith.addf %284, %283 : vector<2x128xf32>
    %286 = arith.divf %284, %285 : vector<2x128xf32>
    %287 = vector.extract_strided_slice %274 {offsets = [0, 256], sizes = [2, 128], strides = [1, 1]} : vector<2x512xf32> to vector<2x128xf32>
    %288 = math.tanh %287 : vector<2x128xf32>
    %289 = vector.extract_strided_slice %274 {offsets = [0, 384], sizes = [2, 128], strides = [1, 1]} : vector<2x512xf32> to vector<2x128xf32>
    %290 = arith.negf %289 : vector<2x128xf32>
    %291 = math.exp %290 : vector<2x128xf32>
    %cst_34 = arith.constant 1.000000e+00 : f32
    %292 = vector.broadcast %cst_34 : f32 to vector<2x128xf32>
    %293 = arith.addf %292, %291 : vector<2x128xf32>
    %294 = arith.divf %292, %293 : vector<2x128xf32>
    %295 = arith.mulf %286, %248 : vector<2x128xf32>
    %296 = arith.mulf %280, %288 : vector<2x128xf32>
    %297 = arith.addf %295, %296 : vector<2x128xf32>
    %298 = math.tanh %297 : vector<2x128xf32>
    %299 = arith.mulf %294, %298 : vector<2x128xf32>
    %300 = vector.extract_strided_slice %0 {offsets = [6, 0, 0], sizes = [1, 2, 3], strides = [1, 1, 1]} : vector<8x2x3xf32> to vector<1x2x3xf32>
    %301 = vector.shape_cast %300 : vector<1x2x3xf32> to vector<2x3xf32>
    %302 = vector.extract_strided_slice %301 {offsets = [0, 0], sizes = [2, 1], strides = [1, 1]} : vector<2x3xf32> to vector<2x1xf32>
    %303 = vector.extract_strided_slice %1 {offsets = [0, 0], sizes = [1, 512], strides = [1, 1]} : vector<3x512xf32> to vector<1x512xf32>
    %304 = vector.broadcast %302 : vector<2x1xf32> to vector<2x512xf32>
    %305 = vector.broadcast %303 : vector<1x512xf32> to vector<2x512xf32>
    %306 = arith.mulf %304, %305 : vector<2x512xf32>
    %307 = vector.broadcast %2 : vector<1x512xf32> to vector<2x512xf32>
    %308 = arith.addf %307, %306 : vector<2x512xf32>
    %309 = vector.extract_strided_slice %301 {offsets = [0, 1], sizes = [2, 1], strides = [1, 1]} : vector<2x3xf32> to vector<2x1xf32>
    %310 = vector.extract_strided_slice %1 {offsets = [1, 0], sizes = [1, 512], strides = [1, 1]} : vector<3x512xf32> to vector<1x512xf32>
    %311 = vector.broadcast %309 : vector<2x1xf32> to vector<2x512xf32>
    %312 = vector.broadcast %310 : vector<1x512xf32> to vector<2x512xf32>
    %313 = arith.mulf %311, %312 : vector<2x512xf32>
    %314 = arith.addf %308, %313 : vector<2x512xf32>
    %315 = vector.extract_strided_slice %301 {offsets = [0, 2], sizes = [2, 1], strides = [1, 1]} : vector<2x3xf32> to vector<2x1xf32>
    %316 = vector.extract_strided_slice %1 {offsets = [2, 0], sizes = [1, 512], strides = [1, 1]} : vector<3x512xf32> to vector<1x512xf32>
    %317 = vector.broadcast %315 : vector<2x1xf32> to vector<2x512xf32>
    %318 = vector.broadcast %316 : vector<1x512xf32> to vector<2x512xf32>
    %319 = arith.mulf %317, %318 : vector<2x512xf32>
    %320 = arith.addf %314, %319 : vector<2x512xf32>
    %321 = arith.truncf %299 : vector<2x128xf32> to vector<2x128xbf16>
    %cst_35 = arith.constant dense<0.000000e+00> : vector<2x512xf32>
    %322 = tpu.matmul %321, %3, %cst_35 {dimension_numbers = #tpu.dot_dimension_numbers<[1], [0], [0], [1], [0, 0, 1, 1], [], []>} : vector<2x128xbf16>, vector<128x512xbf16>, vector<2x512xf32> -> vector<2x512xf32>
    %323 = arith.addf %322, %320 : vector<2x512xf32>
    %324 = vector.extract_strided_slice %323 {offsets = [0, 0], sizes = [2, 128], strides = [1, 1]} : vector<2x512xf32> to vector<2x128xf32>
    %325 = arith.negf %324 : vector<2x128xf32>
    %326 = math.exp %325 : vector<2x128xf32>
    %cst_36 = arith.constant 1.000000e+00 : f32
    %327 = vector.broadcast %cst_36 : f32 to vector<2x128xf32>
    %328 = arith.addf %327, %326 : vector<2x128xf32>
    %329 = arith.divf %327, %328 : vector<2x128xf32>
    %330 = vector.extract_strided_slice %323 {offsets = [0, 128], sizes = [2, 128], strides = [1, 1]} : vector<2x512xf32> to vector<2x128xf32>
    %331 = arith.negf %330 : vector<2x128xf32>
    %332 = math.exp %331 : vector<2x128xf32>
    %cst_37 = arith.constant 1.000000e+00 : f32
    %333 = vector.broadcast %cst_37 : f32 to vector<2x128xf32>
    %334 = arith.addf %333, %332 : vector<2x128xf32>
    %335 = arith.divf %333, %334 : vector<2x128xf32>
    %336 = vector.extract_strided_slice %323 {offsets = [0, 256], sizes = [2, 128], strides = [1, 1]} : vector<2x512xf32> to vector<2x128xf32>
    %337 = math.tanh %336 : vector<2x128xf32>
    %338 = vector.extract_strided_slice %323 {offsets = [0, 384], sizes = [2, 128], strides = [1, 1]} : vector<2x512xf32> to vector<2x128xf32>
    %339 = arith.negf %338 : vector<2x128xf32>
    %340 = math.exp %339 : vector<2x128xf32>
    %cst_38 = arith.constant 1.000000e+00 : f32
    %341 = vector.broadcast %cst_38 : f32 to vector<2x128xf32>
    %342 = arith.addf %341, %340 : vector<2x128xf32>
    %343 = arith.divf %341, %342 : vector<2x128xf32>
    %344 = arith.mulf %335, %297 : vector<2x128xf32>
    %345 = arith.mulf %329, %337 : vector<2x128xf32>
    %346 = arith.addf %344, %345 : vector<2x128xf32>
    %347 = math.tanh %346 : vector<2x128xf32>
    %348 = arith.mulf %343, %347 : vector<2x128xf32>
    %349 = vector.extract_strided_slice %0 {offsets = [7, 0, 0], sizes = [1, 2, 3], strides = [1, 1, 1]} : vector<8x2x3xf32> to vector<1x2x3xf32>
    %350 = vector.shape_cast %349 : vector<1x2x3xf32> to vector<2x3xf32>
    %351 = vector.extract_strided_slice %350 {offsets = [0, 0], sizes = [2, 1], strides = [1, 1]} : vector<2x3xf32> to vector<2x1xf32>
    %352 = vector.extract_strided_slice %1 {offsets = [0, 0], sizes = [1, 512], strides = [1, 1]} : vector<3x512xf32> to vector<1x512xf32>
    %353 = vector.broadcast %351 : vector<2x1xf32> to vector<2x512xf32>
    %354 = vector.broadcast %352 : vector<1x512xf32> to vector<2x512xf32>
    %355 = arith.mulf %353, %354 : vector<2x512xf32>
    %356 = vector.broadcast %2 : vector<1x512xf32> to vector<2x512xf32>
    %357 = arith.addf %356, %355 : vector<2x512xf32>
    %358 = vector.extract_strided_slice %350 {offsets = [0, 1], sizes = [2, 1], strides = [1, 1]} : vector<2x3xf32> to vector<2x1xf32>
    %359 = vector.extract_strided_slice %1 {offsets = [1, 0], sizes = [1, 512], strides = [1, 1]} : vector<3x512xf32> to vector<1x512xf32>
    %360 = vector.broadcast %358 : vector<2x1xf32> to vector<2x512xf32>
    %361 = vector.broadcast %359 : vector<1x512xf32> to vector<2x512xf32>
    %362 = arith.mulf %360, %361 : vector<2x512xf32>
    %363 = arith.addf %357, %362 : vector<2x512xf32>
    %364 = vector.extract_strided_slice %350 {offsets = [0, 2], sizes = [2, 1], strides = [1, 1]} : vector<2x3xf32> to vector<2x1xf32>
    %365 = vector.extract_strided_slice %1 {offsets = [2, 0], sizes = [1, 512], strides = [1, 1]} : vector<3x512xf32> to vector<1x512xf32>
    %366 = vector.broadcast %364 : vector<2x1xf32> to vector<2x512xf32>
    %367 = vector.broadcast %365 : vector<1x512xf32> to vector<2x512xf32>
    %368 = arith.mulf %366, %367 : vector<2x512xf32>
    %369 = arith.addf %363, %368 : vector<2x512xf32>
    %370 = arith.truncf %348 : vector<2x128xf32> to vector<2x128xbf16>
    %cst_39 = arith.constant dense<0.000000e+00> : vector<2x512xf32>
    %371 = tpu.matmul %370, %3, %cst_39 {dimension_numbers = #tpu.dot_dimension_numbers<[1], [0], [0], [1], [0, 0, 1, 1], [], []>} : vector<2x128xbf16>, vector<128x512xbf16>, vector<2x512xf32> -> vector<2x512xf32>
    %372 = arith.addf %371, %369 : vector<2x512xf32>
    %373 = vector.extract_strided_slice %372 {offsets = [0, 0], sizes = [2, 128], strides = [1, 1]} : vector<2x512xf32> to vector<2x128xf32>
    %374 = arith.negf %373 : vector<2x128xf32>
    %375 = math.exp %374 : vector<2x128xf32>
    %cst_40 = arith.constant 1.000000e+00 : f32
    %376 = vector.broadcast %cst_40 : f32 to vector<2x128xf32>
    %377 = arith.addf %376, %375 : vector<2x128xf32>
    %378 = arith.divf %376, %377 : vector<2x128xf32>
    %379 = vector.extract_strided_slice %372 {offsets = [0, 128], sizes = [2, 128], strides = [1, 1]} : vector<2x512xf32> to vector<2x128xf32>
    %380 = arith.negf %379 : vector<2x128xf32>
    %381 = math.exp %380 : vector<2x128xf32>
    %cst_41 = arith.constant 1.000000e+00 : f32
    %382 = vector.broadcast %cst_41 : f32 to vector<2x128xf32>
    %383 = arith.addf %382, %381 : vector<2x128xf32>
    %384 = arith.divf %382, %383 : vector<2x128xf32>
    %385 = vector.extract_strided_slice %372 {offsets = [0, 256], sizes = [2, 128], strides = [1, 1]} : vector<2x512xf32> to vector<2x128xf32>
    %386 = math.tanh %385 : vector<2x128xf32>
    %387 = vector.extract_strided_slice %372 {offsets = [0, 384], sizes = [2, 128], strides = [1, 1]} : vector<2x512xf32> to vector<2x128xf32>
    %388 = arith.negf %387 : vector<2x128xf32>
    %389 = math.exp %388 : vector<2x128xf32>
    %cst_42 = arith.constant 1.000000e+00 : f32
    %390 = vector.broadcast %cst_42 : f32 to vector<2x128xf32>
    %391 = arith.addf %390, %389 : vector<2x128xf32>
    %392 = arith.divf %390, %391 : vector<2x128xf32>
    %393 = arith.mulf %384, %346 : vector<2x128xf32>
    %394 = arith.mulf %378, %386 : vector<2x128xf32>
    %395 = arith.addf %393, %394 : vector<2x128xf32>
    %396 = math.tanh %395 : vector<2x128xf32>
    %397 = arith.mulf %392, %396 : vector<2x128xf32>
    %c0_43 = arith.constant 0 : index
    %c0_44 = arith.constant 0 : index
    %398 = vector.load %arg9[%c0_43, %c0_44] : memref<2x128xf32, #tpu.memory_space<vmem>>, vector<2x128xf32>
    tpu.vector_store %arg9[%c0_43, %c0_44], %397 {strides = array<i32>} : memref<2x128xf32, #tpu.memory_space<vmem>>, vector<2x128xf32>,
    %c0_45 = arith.constant 0 : index
    %c0_46 = arith.constant 0 : index
    %399 = vector.load %arg10[%c0_45, %c0_46] : memref<2x128xf32, #tpu.memory_space<vmem>>, vector<2x128xf32>
    tpu.vector_store %arg10[%c0_45, %c0_46], %395 {strides = array<i32>} : memref<2x128xf32, #tpu.memory_space<vmem>>, vector<2x128xf32>,
    %400 = tpu.concatenate %54, %103, %152, %201, %250, %299, %348, %397 in 0 : vector<2x128xf32>, vector<2x128xf32>, vector<2x128xf32>, vector<2x128xf32>, vector<2x128xf32>, vector<2x128xf32>, vector<2x128xf32>, vector<2x128xf32> -> vector<16x128xf32>
    %401 = arith.truncf %400 : vector<16x128xf32> to vector<16x128xbf16>
    %c0_47 = arith.constant 0 : index
    %c0_48 = arith.constant 0 : index
    %402 = vector.load %arg4[%c0_47, %c0_48] : memref<128x128xbf16, #tpu.memory_space<vmem>>, vector<128x128xbf16>
    %cst_49 = arith.constant dense<0.000000e+00> : vector<16x128xf32>
    %403 = tpu.matmul %401, %402, %cst_49 {dimension_numbers = #tpu.dot_dimension_numbers<[1], [0], [0], [1], [0, 0, 1, 1], [], []>} : vector<16x128xbf16>, vector<128x128xbf16>, vector<16x128xf32> -> vector<16x128xf32>
    %c0_50 = arith.constant 0 : index
    %c0_51 = arith.constant 0 : index
    %404 = vector.load %arg5[%c0_50, %c0_51] : memref<1x128xf32, #tpu.memory_space<vmem>>, vector<1x128xf32>
    %405 = vector.broadcast %404 : vector<1x128xf32> to vector<16x128xf32>
    %406 = arith.addf %403, %405 : vector<16x128xf32>
    %407 = tpu.iota {dimensions = array<i32: 1>} : vector<16x128xi32>
    %c0_i32 = arith.constant 0 : i32
    %408 = vector.broadcast %c0_i32 : i32 to vector<16x128xi32>
    %409 = arith.cmpi eq, %407, %408 : vector<16x128xi32>
    %c1_i32 = arith.constant 1 : i32
    %410 = vector.broadcast %c1_i32 : i32 to vector<16x128xi32>
    %411 = arith.cmpi sge, %407, %410 : vector<16x128xi32>
    %c21_i32 = arith.constant 21 : i32
    %412 = vector.broadcast %c21_i32 : i32 to vector<16x128xi32>
    %413 = arith.cmpi slt, %407, %412 : vector<16x128xi32>
    %414 = arith.andi %411, %413 : vector<16x128xi1>
    %c61_i32 = arith.constant 61 : i32
    %415 = vector.broadcast %c61_i32 : i32 to vector<16x128xi32>
    %416 = arith.cmpi sge, %407, %415 : vector<16x128xi32>
    %c101_i32 = arith.constant 101 : i32
    %417 = vector.broadcast %c101_i32 : i32 to vector<16x128xi32>
    %418 = arith.cmpi slt, %407, %417 : vector<16x128xi32>
    %419 = arith.andi %416, %418 : vector<16x128xi1>
    %c101_i32_52 = arith.constant 101 : i32
    %420 = vector.broadcast %c101_i32_52 : i32 to vector<16x128xi32>
    %421 = arith.cmpi sge, %407, %420 : vector<16x128xi32>
    %cst_53 = arith.constant -1.000000e+30 : f32
    %422 = vector.broadcast %cst_53 : f32 to vector<16x128xf32>
    %423 = arith.select %414, %406, %422 : vector<16x128xi1>, vector<16x128xf32>
    %cst_54 = arith.constant dense<0xFF800000> : vector<16xf32>
    %424 = vector.multi_reduction <maximumf>, %423, %cst_54 [1] : vector<16x128xf32> to vector<16xf32>
    %425 = vector.shape_cast %424 : vector<16xf32> to vector<16x1xf32>
    %426 = vector.broadcast %425 : vector<16x1xf32> to vector<16x128xf32>
    %427 = arith.subf %423, %426 : vector<16x128xf32>
    %428 = math.exp %427 : vector<16x128xf32>
    %cst_55 = arith.constant dense<0.000000e+00> : vector<16xf32>
    %429 = vector.multi_reduction <add>, %428, %cst_55 [1] : vector<16x128xf32> to vector<16xf32>
    %430 = vector.shape_cast %429 : vector<16xf32> to vector<16x1xf32>
    %431 = tpu.reciprocal %430 {approx = true} : vector<16x1xf32> -> vector<16x1xf32>
    %432 = vector.broadcast %431 : vector<16x1xf32> to vector<16x128xf32>
    %433 = arith.mulf %428, %432 : vector<16x128xf32>
    %434 = arith.negf %406 : vector<16x128xf32>
    %435 = math.exp %434 : vector<16x128xf32>
    %cst_56 = arith.constant 1.000000e+00 : f32
    %436 = vector.broadcast %cst_56 : f32 to vector<16x128xf32>
    %437 = arith.addf %436, %435 : vector<16x128xf32>
    %438 = arith.divf %436, %437 : vector<16x128xf32>
    %439 = arith.select %409, %438, %406 : vector<16x128xi1>, vector<16x128xf32>
    %440 = arith.select %414, %433, %439 : vector<16x128xi1>, vector<16x128xf32>
    %441 = math.exp %406 : vector<16x128xf32>
    %442 = arith.select %419, %441, %440 : vector<16x128xi1>, vector<16x128xf32>
    %443 = math.tanh %406 : vector<16x128xf32>
    %444 = arith.select %421, %443, %442 : vector<16x128xi1>, vector<16x128xf32>
    %c0_57 = arith.constant 0 : index
    %c0_58 = arith.constant 0 : index
    %445 = vector.load %arg8[%c0_57, %c0_58] : memref<16x128xf32, #tpu.memory_space<vmem>>, vector<16x128xf32>
    tpu.vector_store %arg8[%c0_57, %c0_58], %444 {strides = array<i32>} : memref<16x128xf32, #tpu.memory_space<vmem>>, vector<16x128xf32>,
    return
  }
}

</mosaic_0001>

<llo_original>
// kernel: tpu_custom_call.1
$region0: #{tpu_custom_call.1}
  #allocation0 [shape = 'u32[]', space=smem, size = 0x4, offset = 0x4, fixed_abs, tag = 'smem constant byte address 0x4 - core index']
  #allocation1 [shape = 'u32[72,128]{1,0:T(1,128)}', space=vmem, size = 0x9000, scoped, tag = 'internal scratch']
  %s0 = inlined_call_operand.vmem [shape: f32[8,2,3], index: 0, kind: input, shape index: {}]
  %s1 = inlined_call_operand.vmem [shape: f32[3,512], index: 1, kind: input, shape index: {}]
  %s2 = inlined_call_operand.hbm [shape: bf16[128,512], index: 2, kind: input, shape index: {}]
  %s3 = inlined_call_operand.vmem [shape: f32[1,512], index: 3, kind: input, shape index: {}]
  %s4 = inlined_call_operand.hbm [shape: bf16[128,128], index: 4, kind: input, shape index: {}]
  %s5 = inlined_call_operand.vmem [shape: f32[1,128], index: 5, kind: input, shape index: {}]
  %s6 = inlined_call_operand.vmem [shape: f32[2,128], index: 6, kind: input, shape index: {}]
  %s7 = inlined_call_operand.vmem [shape: f32[2,128], index: 7, kind: input, shape index: {}]
  %s8 = inlined_call_operand.hbm [shape: f32[16,128], index: 8, kind: output, shape index: {0}]
  %s9 = inlined_call_operand.hbm [shape: f32[2,128], index: 9, kind: output, shape index: {1}]
  %s10 = inlined_call_operand.hbm [shape: f32[2,128], index: 10, kind: output, shape index: {2}]
  %11 = xla_tuple %s8, %s9, %s10
  %s12 = sld [smem:[#allocation0]]
  $region66: #{tpu_custom_call.1} parent=0
    _
  %s14 = ssub.s32 1, %s12
  %s15 = scalar_select 0, %s14, %s12
  $region1: #{tpu_custom_call.1} parent=0
    #allocation2 [shape = 'u8[131072]{0}', space=vmem, size = 0x20000, scoped, tag = 'input window, operand 2, single buffered']
    #allocation3 [shape = 's32[1]{0}', space=sflag, size = 0x4, scoped, tag = 'scoped memory for tpu_custom_call.1']
    #allocation4 [shape = 's32[1]{0}', space=sflag, size = 0x4, scoped, tag = 'scoped memory for tpu_custom_call.1']
    #allocation5 [shape = 'u8[32768]{0}', space=vmem, size = 0x8000, scoped, tag = 'input window, operand 4, single buffered']
    #allocation6 [shape = 's32[1]{0}', space=sflag, size = 0x4, scoped, tag = 'scoped memory for tpu_custom_call.1']
    #allocation7 [shape = 'u8[8192]{0}', space=vmem, size = 0x2000, scoped, tag = 'output window, operand 0, single buffered']
    #allocation8 [shape = 'u8[1024]{0}', space=vmem, size = 0x400, scoped, tag = 'output window, operand 1, single buffered']
    #allocation9 [shape = 's32[1]{0}', space=sflag, size = 0x4, scoped, tag = 'scoped memory for tpu_custom_call.1']
    #allocation10 [shape = 'u8[1024]{0}', space=vmem, size = 0x400, scoped, tag = 'output window, operand 2, single buffered']
    %16 = vsyncpa [#allocation3], 0
    %17 = vsyncpa [#allocation6], 0
    %18 = vsyncpa [#allocation4], 0
    %19 = vsyncpa [#allocation9], 0
    // Predicated region
    $region2: #{tpu_custom_call.1} parent=1 // pred_check
      _
    $region3: #{tpu_custom_call.1} parent=1 // pred_check_branch
      %21 = sbr.rel (0) target = $region5
    $region4: #{tpu_custom_call.1} parent=1 // pred_region
      _
    $region5: #{tpu_custom_call.1} parent=1 // pred_fallthru
      _
    // Predicated region
    $region6: #{tpu_custom_call.1} parent=1 // pred_check
      _
    $region7: #{tpu_custom_call.1} parent=1 // pred_check_branch
      %23 = sbr.rel (0) target = $region9
    $region8: #{tpu_custom_call.1} parent=1 // pred_region
      _
    $region9: #{tpu_custom_call.1} parent=1 // pred_fallthru
      _
    // Predicated region
    $region10: #{tpu_custom_call.1} parent=1 // pred_check
      _
    $region11: #{tpu_custom_call.1} parent=1 // pred_check_branch
      %25 = sbr.rel (0) target = $region13
    $region12: #{tpu_custom_call.1} parent=1 // pred_region
      %27 = vsyncadd [#allocation3], 0
      %s28 = sshll.u32 %s2, 4
      %s29 = int_to_ptr.hbm [resolvable:$true] %s28
      %s30 = sshll.u32 [#allocation2], 4
      %s31 = int_to_ptr.vmem [resolvable:$true] %s30
      %36 = dma.hbm_to_vmem [thread:$0]  %s29, 4096, %s31, [#allocation3], 256, 256, 16
    $region13: #{tpu_custom_call.1} parent=1 // pred_fallthru
      _
    // Predicated region
    $region14: #{tpu_custom_call.1} parent=1 // pred_check
      _
    $region15: #{tpu_custom_call.1} parent=1 // pred_check_branch
      %38 = sbr.rel (0) target = $region17
    $region16: #{tpu_custom_call.1} parent=1 // pred_region
      _
    $region17: #{tpu_custom_call.1} parent=1 // pred_fallthru
      _
    // Predicated region
    $region18: #{tpu_custom_call.1} parent=1 // pred_check
      _
    $region19: #{tpu_custom_call.1} parent=1 // pred_check_branch
      %40 = sbr.rel (0) target = $region21
    $region20: #{tpu_custom_call.1} parent=1 // pred_region
      %42 = vsyncadd [#allocation6], 0
      %s43 = sshll.u32 %s4, 4
      %s44 = int_to_ptr.hbm [resolvable:$true] %s43
      %s45 = sshll.u32 [#allocation5], 4
      %s46 = int_to_ptr.vmem [resolvable:$true] %s45
      %51 = dma.hbm_to_vmem [thread:$0]  %s44, 1024, %s46, [#allocation6], 64, 64, 4
    $region21: #{tpu_custom_call.1} parent=1 // pred_fallthru
      _
    // Predicated region
    $region22: #{tpu_custom_call.1} parent=1 // pred_check
      _
    $region23: #{tpu_custom_call.1} parent=1 // pred_check_branch
      %53 = sbr.rel (0) target = $region25
    $region24: #{tpu_custom_call.1} parent=1 // pred_region
      _
    $region25: #{tpu_custom_call.1} parent=1 // pred_fallthru
      _
    // Predicated region
    $region26: #{tpu_custom_call.1} parent=1 // pred_check
      _
    $region27: #{tpu_custom_call.1} parent=1 // pred_check_branch
      %55 = sbr.rel (0) target = $region29
    $region28: #{tpu_custom_call.1} parent=1 // pred_region
      _
    $region29: #{tpu_custom_call.1} parent=1 // pred_fallthru
      _
    // Predicated region
    $region30: #{tpu_custom_call.1} parent=1 // pred_check
      _
    $region31: #{tpu_custom_call.1} parent=1 // pred_check_branch
      %57 = sbr.rel (0) target = $region33
    $region32: #{tpu_custom_call.1} parent=1 // pred_region
      _
    $region33: #{tpu_custom_call.1} parent=1 // pred_fallthru
      _
    // Predicated region
    $region34: #{tpu_custom_call.1} parent=1 // pred_check
      _
    $region35: #{tpu_custom_call.1} parent=1 // pred_check_branch
      %59 = sbr.rel (0) target = $region37
    $region36: #{tpu_custom_call.1} parent=1 // pred_region
      %61 = dma.done [#allocation3], 4096
    $region37: #{tpu_custom_call.1} parent=1 // pred_fallthru
      _
    // Predicated region
    $region38: #{tpu_custom_call.1} parent=1 // pred_check
      _
    $region39: #{tpu_custom_call.1} parent=1 // pred_check_branch
      %63 = sbr.rel (0) target = $region41
    $region40: #{tpu_custom_call.1} parent=1 // pred_region
      %65 = dma.done [#allocation6], 1024
    $region41: #{tpu_custom_call.1} parent=1 // pred_fallthru
      _
    %v66 = vld [vmem:[%s0] sm:$0x3]
    %v67 = vld [vmem:[%s0 + $0x2] sm:$0x3]
    %v68 = vld [vmem:[%s0 + $0x4] sm:$0x3]
    %v69 = vld [vmem:[%s0 + $0x6] sm:$0x3]
    %v70 = vld [vmem:[%s0 + $0x8] sm:$0x3]
    %v71 = vld [vmem:[%s0 + $0xa] sm:$0x3]
    %v72 = vld [vmem:[%s0 + $0xc] sm:$0x3]
    %v73 = vld [vmem:[%s0 + $0xe] sm:$0x3]
    %v74 = vld [vmem:[%s1] sm:$0x77]
    %v75 = vld [vmem:[%s1 + $0x8] sm:$0x77]
    %v76 = vld [vmem:[%s3] sm:$0xf]
    %v77 = vld [vmem:[#allocation2] sm:$0xff]
    %v78 = vld [vmem:[#allocation2 + $0x8] sm:$0xff]
    %v79 = vld [vmem:[#allocation2 + $0x10] sm:$0xff]
    %v80 = vld [vmem:[#allocation2 + $0x18] sm:$0xff]
    %v81 = vld [vmem:[#allocation2 + $0x20] sm:$0xff]
    %v82 = vld [vmem:[#allocation2 + $0x28] sm:$0xff]
    %v83 = vld [vmem:[#allocation2 + $0x30] sm:$0xff]
    %v84 = vld [vmem:[#allocation2 + $0x38] sm:$0xff]
    %v85 = vld [vmem:[#allocation2 + $0x40] sm:$0xff]
    %v86 = vld [vmem:[#allocation2 + $0x48] sm:$0xff]
    %v87 = vld [vmem:[#allocation2 + $0x50] sm:$0xff]
    %v88 = vld [vmem:[#allocation2 + $0x58] sm:$0xff]
    %v89 = vld [vmem:[#allocation2 + $0x60] sm:$0xff]
    %v90 = vld [vmem:[#allocation2 + $0x68] sm:$0xff]
    %v91 = vld [vmem:[#allocation2 + $0x70] sm:$0xff]
    %v92 = vld [vmem:[#allocation2 + $0x78] sm:$0xff]
    %v93 = vld [vmem:[#allocation2 + $0x80] sm:$0xff]
    %v94 = vld [vmem:[#allocation2 + $0x88] sm:$0xff]
    %v95 = vld [vmem:[#allocation2 + $0x90] sm:$0xff]
    %v96 = vld [vmem:[#allocation2 + $0x98] sm:$0xff]
    %v97 = vld [vmem:[#allocation2 + $0xa0] sm:$0xff]
    %v98 = vld [vmem:[#allocation2 + $0xa8] sm:$0xff]
    %v99 = vld [vmem:[#allocation2 + $0xb0] sm:$0xff]
    %v100 = vld [vmem:[#allocation2 + $0xb8] sm:$0xff]
    %v101 = vld [vmem:[#allocation2 + $0xc0] sm:$0xff]
    %v102 = vld [vmem:[#allocation2 + $0xc8] sm:$0xff]
    %v103 = vld [vmem:[#allocation2 + $0xd0] sm:$0xff]
    %v104 = vld [vmem:[#allocation2 + $0xd8] sm:$0xff]
    %v105 = vld [vmem:[#allocation2 + $0xe0] sm:$0xff]
    %v106 = vld [vmem:[#allocation2 + $0xe8] sm:$0xff]
    %v107 = vld [vmem:[#allocation2 + $0xf0] sm:$0xff]
    %v108 = vld [vmem:[#allocation2 + $0xf8] sm:$0xff]
    %v109 = vld [vmem:[%s6] sm:$0x3]
    %v110 = vld [vmem:[%s7] sm:$0x3]
    %112 = vset.pattern.permute.xlu0 0
    %113 = vperm.xlu0 %112, %v66
    %v114 = vpop.permute.xlu0 %113
    %v118 = vperm.slane %v74, 0
    %v119 = vperm.slane %v74, 4
    %v120 = vperm.slane %v75, 0
    %v121 = vperm.slane %v75, 4
    %v126 = vperm.slane %v118, 0
    %v127 = vperm.slane %v119, 0
    %v128 = vperm.slane %v120, 0
    %v129 = vperm.slane %v121, 0
    %v130 = vmul.f32 %v114, %v126
    %v131 = vmul.f32 %v114, %v127
    %v132 = vmul.f32 %v114, %v128
    %v133 = vmul.f32 %v114, %v129
    %v135 = vperm.slane %v76, 0
    %v136 = vperm.slane %v76, 1
    %v137 = vperm.slane %v76, 2
    %v138 = vperm.slane %v76, 3
    %v143 = vadd.f32 %v135, %v130
    %v144 = vadd.f32 %v136, %v131
    %v145 = vadd.f32 %v137, %v132
    %v146 = vadd.f32 %v138, %v133
    %147 = vset.pattern.permute.xlu0 1
    %148 = vperm.xlu0 %147, %v66
    %v149 = vpop.permute.xlu0 %148
    %v151 = vperm.slane %v74, 1
    %v152 = vperm.slane %v74, 5
    %v153 = vperm.slane %v75, 1
    %v154 = vperm.slane %v75, 5
    %v159 = vperm.slane %v151, 1
    %v160 = vperm.slane %v152, 1
    %v161 = vperm.slane %v153, 1
    %v162 = vperm.slane %v154, 1
    %v163 = vmul.f32 %v149, %v159
    %v164 = vmul.f32 %v149, %v160
    %v165 = vmul.f32 %v149, %v161
    %v166 = vmul.f32 %v149, %v162
    %v167 = vadd.f32 %v143, %v163
    %v168 = vadd.f32 %v144, %v164
    %v169 = vadd.f32 %v145, %v165
    %v170 = vadd.f32 %v146, %v166
    %171 = vset.pattern.permute.xlu0 2
    %172 = vperm.xlu0 %171, %v66
    %v173 = vpop.permute.xlu0 %172
    %v175 = vperm.slane %v74, 2
    %v176 = vperm.slane %v74, 6
    %v177 = vperm.slane %v75, 2
    %v178 = vperm.slane %v75, 6
    %v183 = vperm.slane %v175, 2
    %v184 = vperm.slane %v176, 2
    %v185 = vperm.slane %v177, 2
    %v186 = vperm.slane %v178, 2
    %v187 = vmul.f32 %v173, %v183
    %v188 = vmul.f32 %v173, %v184
    %v189 = vmul.f32 %v173, %v185
    %v190 = vmul.f32 %v173, %v186
    %v191 = vadd.f32 %v167, %v187
    %v192 = vadd.f32 %v168, %v188
    %v193 = vadd.f32 %v169, %v189
    %v194 = vadd.f32 %v170, %v190
    %v195 = vpack.c.bf16 %v109, %v109
    %v228 = vunpack.c.l.b16 %v77
    %v229 = vunpack.c.h.b16 %v77
    %v230 = vunpack.c.l.b16 %v78
    %v231 = vunpack.c.h.b16 %v78
    %v232 = vunpack.c.l.b16 %v79
    %v233 = vunpack.c.h.b16 %v79
    %v234 = vunpack.c.l.b16 %v80
    %v235 = vunpack.c.h.b16 %v80
    %v236 = vunpack.c.l.b16 %v81
    %v237 = vunpack.c.h.b16 %v81
    %v238 = vunpack.c.l.b16 %v82
    %v239 = vunpack.c.h.b16 %v82
    %v240 = vunpack.c.l.b16 %v83
    %v241 = vunpack.c.h.b16 %v83
    %v242 = vunpack.c.l.b16 %v84
    %v243 = vunpack.c.h.b16 %v84
    %v244 = vunpack.c.l.b16 %v85
    %v245 = vunpack.c.h.b16 %v85
    %v246 = vunpack.c.l.b16 %v86
    %v247 = vunpack.c.h.b16 %v86
    %v248 = vunpack.c.l.b16 %v87
    %v249 = vunpack.c.h.b16 %v87
    %v250 = vunpack.c.l.b16 %v88
    %v251 = vunpack.c.h.b16 %v88
    %v252 = vunpack.c.l.b16 %v89
    %v253 = vunpack.c.h.b16 %v89
    %v254 = vunpack.c.l.b16 %v90
    %v255 = vunpack.c.h.b16 %v90
    %v256 = vunpack.c.l.b16 %v91
    %v257 = vunpack.c.h.b16 %v91
    %v258 = vunpack.c.l.b16 %v92
    %v259 = vunpack.c.h.b16 %v92
    %v260 = vunpack.c.l.b16 %v93
    %v261 = vunpack.c.h.b16 %v93
    %v262 = vunpack.c.l.b16 %v94
    %v263 = vunpack.c.h.b16 %v94
    %v264 = vunpack.c.l.b16 %v95
    %v265 = vunpack.c.h.b16 %v95
    %v266 = vunpack.c.l.b16 %v96
    %v267 = vunpack.c.h.b16 %v96
    %v268 = vunpack.c.l.b16 %v97
    %v269 = vunpack.c.h.b16 %v97
    %v270 = vunpack.c.l.b16 %v98
    %v271 = vunpack.c.h.b16 %v98
    %v272 = vunpack.c.l.b16 %v99
    %v273 = vunpack.c.h.b16 %v99
    %v274 = vunpack.c.l.b16 %v100
    %v275 = vunpack.c.h.b16 %v100
    %v276 = vunpack.c.l.b16 %v101
    %v277 = vunpack.c.h.b16 %v101
    %v278 = vunpack.c.l.b16 %v102
    %v279 = vunpack.c.h.b16 %v102
    %v280 = vunpack.c.l.b16 %v103
    %v281 = vunpack.c.h.b16 %v103
    %v282 = vunpack.c.l.b16 %v104
    %v283 = vunpack.c.h.b16 %v104
    %v284 = vunpack.c.l.b16 %v105
    %v285 = vunpack.c.h.b16 %v105
    %v286 = vunpack.c.l.b16 %v106
    %v287 = vunpack.c.h.b16 %v106
    %v288 = vunpack.c.l.b16 %v107
    %v289 = vunpack.c.h.b16 %v107
    %v290 = vunpack.c.l.b16 %v108
    %v291 = vunpack.c.h.b16 %v108
    %v292 = vpack.c.b16 %v232, %v228
    %v293 = vpack.c.b16 %v233, %v229
    %v294 = vpack.c.b16 %v234, %v230
    %v295 = vpack.c.b16 %v235, %v231
    %v296 = vpack.c.b16 %v240, %v236
    %v297 = vpack.c.b16 %v241, %v237
    %v298 = vpack.c.b16 %v242, %v238
    %v299 = vpack.c.b16 %v243, %v239
    %v300 = vpack.c.b16 %v248, %v244
    %v301 = vpack.c.b16 %v249, %v245
    %v302 = vpack.c.b16 %v250, %v246
    %v303 = vpack.c.b16 %v251, %v247
    %v304 = vpack.c.b16 %v256, %v252
    %v305 = vpack.c.b16 %v257, %v253
    %v306 = vpack.c.b16 %v258, %v254
    %v307 = vpack.c.b16 %v259, %v255
    %v308 = vpack.c.b16 %v264, %v260
    %v309 = vpack.c.b16 %v265, %v261
    %v310 = vpack.c.b16 %v266, %v262
    %v311 = vpack.c.b16 %v267, %v263
    %v312 = vpack.c.b16 %v272, %v268
    %v313 = vpack.c.b16 %v273, %v269
    %v314 = vpack.c.b16 %v274, %v270
    %v315 = vpack.c.b16 %v275, %v271
    %v316 = vpack.c.b16 %v280, %v276
    %v317 = vpack.c.b16 %v281, %v277
    %v318 = vpack.c.b16 %v282, %v278
    %v319 = vpack.c.b16 %v283, %v279
    %v320 = vpack.c.b16 %v288, %v284
    %v321 = vpack.c.b16 %v289, %v285
    %v322 = vpack.c.b16 %v290, %v286
    %v323 = vpack.c.b16 %v291, %v287
    %356 = vmatpush.bf16.msra.mxu0 %v320
    %357 = vmatpush.bf16.msra.mxu0 %v316
    %358 = vmatpush.bf16.msra.mxu0 %v312
    %359 = vmatpush.bf16.msra.mxu0 %v308
    %360 = vmatpush.bf16.msra.mxu0 %v304
    %361 = vmatpush.bf16.msra.mxu0 %v300
    %362 = vmatpush.bf16.msra.mxu0 %v296
    %363 = vmatpush.bf16.msra.mxu0 %v292
    %364 = vmatmul.bf16.gmra.mxu0 %v195
    %v365 = vpop.f32.mrf.mxu0
    %v366 = vadd.f32 %v191, %v365
    %v367 = vpop.f32.mrf.mxu0
    %368 = vdwg.mxu0
    %369 = vmatpush.bf16.msra.mxu0 %v321
    %370 = vmatpush.bf16.msra.mxu0 %v317
    %371 = vmatpush.bf16.msra.mxu0 %v313
    %372 = vmatpush.bf16.msra.mxu0 %v309
    %373 = vmatpush.bf16.msra.mxu0 %v305
    %374 = vmatpush.bf16.msra.mxu0 %v301
    %375 = vmatpush.bf16.msra.mxu0 %v297
    %376 = vmatpush.bf16.msra.mxu0 %v293
    %377 = vmatmul.bf16.gmra.mxu0 %v195
    %v378 = vpop.f32.mrf.mxu0
    %v379 = vadd.f32 %v192, %v378
    %v380 = vpop.f32.mrf.mxu0
    %381 = vdwg.mxu0
    %382 = vmatpush.bf16.msra.mxu0 %v322
    %383 = vmatpush.bf16.msra.mxu0 %v318
    %384 = vmatpush.bf16.msra.mxu0 %v314
    %385 = vmatpush.bf16.msra.mxu0 %v310
    %386 = vmatpush.bf16.msra.mxu0 %v306
    %387 = vmatpush.bf16.msra.mxu0 %v302
    %388 = vmatpush.bf16.msra.mxu0 %v298
    %389 = vmatpush.bf16.msra.mxu0 %v294
    %390 = vmatmul.bf16.gmra.mxu0 %v195
    %v391 = vpop.f32.mrf.mxu0
    %v392 = vadd.f32 %v193, %v391
    %v393 = vpop.f32.mrf.mxu0
    %394 = vdwg.mxu0
    %395 = vmatpush.bf16.msra.mxu0 %v323
    %396 = vmatpush.bf16.msra.mxu0 %v319
    %397 = vmatpush.bf16.msra.mxu0 %v315
    %398 = vmatpush.bf16.msra.mxu0 %v311
    %399 = vmatpush.bf16.msra.mxu0 %v307
    %400 = vmatpush.bf16.msra.mxu0 %v303
    %401 = vmatpush.bf16.msra.mxu0 %v299
    %402 = vmatpush.bf16.msra.mxu0 %v295
    %403 = vmatmul.bf16.gmra.mxu0 %v195
    %v404 = vpop.f32.mrf.mxu0
    %v405 = vadd.f32 %v194, %v404
    %v406 = vpop.f32.mrf.mxu0
    %407 = vdwg.mxu0
    %v408 = vxor.u32 %v366, 2147483648
    %v409 = vmul.f32 %v408, 1.442695
    %v410 = vpow.pop %v409
    %v411 = vadd.f32 %v410, 1.0
    %v412 = vrcp.pop %v411
    %v413 = vmul.f32 %v411, %v412
    %v414 = vsub.f32 1.0, %v413
    %v415 = vmul.f32 %v412, %v414
    %v416 = vadd.f32 %v412, %v415
    %vm417 = vweird.f32 %v411
    %vm418 = vweird.f32 %v412
    %vm419 = vmor %vm417, %vm418
    %v420 = vsel %vm419, %v412, %v416
    %v421 = vand.u32 2147483647, %v411
    %vm422 = vcmp.eq.f32.partialorder %v421, 8.507059e+37
    %v423 = vand.u32 %v411, 2147483648
    %v424 = vor.u32 1.1754944e-38, %v423
    %v425 = vsel %vm422, %v424, %v420
    %v426 = vmul.f32 1.0, %v425
    %v427 = vxor.u32 %v379, 2147483648
    %v428 = vmul.f32 %v427, 1.442695
    %v429 = vpow.pop %v428
    %v430 = vadd.f32 %v429, 1.0
    %v431 = vrcp.pop %v430
    %v432 = vmul.f32 %v430, %v431
    %v433 = vsub.f32 1.0, %v432
    %v434 = vmul.f32 %v431, %v433
    %v435 = vadd.f32 %v431, %v434
    %vm436 = vweird.f32 %v430
    %vm437 = vweird.f32 %v431
    %vm438 = vmor %vm436, %vm437
    %v439 = vsel %vm438, %v431, %v435
    %v440 = vand.u32 2147483647, %v430
    %vm441 = vcmp.eq.f32.partialorder %v440, 8.507059e+37
    %v442 = vand.u32 %v430, 2147483648
    %v443 = vor.u32 1.1754944e-38, %v442
    %v444 = vsel %vm441, %v443, %v439
    %v445 = vmul.f32 1.0, %v444
    %v446 = vtanh.pop %v392
    %v447 = vxor.u32 %v405, 2147483648
    %v448 = vmul.f32 %v447, 1.442695
    %v449 = vpow.pop %v448
    %v450 = vadd.f32 %v449, 1.0
    %v451 = vrcp.pop %v450
    %v452 = vmul.f32 %v450, %v451
    %v453 = vsub.f32 1.0, %v452
    %v454 = vmul.f32 %v451, %v453
    %v455 = vadd.f32 %v451, %v454
    %vm456 = vweird.f32 %v450
    %vm457 = vweird.f32 %v451
    %vm458 = vmor %vm456, %vm457
    %v459 = vsel %vm458, %v451, %v455
    %v460 = vand.u32 2147483647, %v450
    %vm461 = vcmp.eq.f32.partialorder %v460, 8.507059e+37
    %v462 = vand.u32 %v450, 2147483648
    %v463 = vor.u32 1.1754944e-38, %v462
    %v464 = vsel %vm461, %v463, %v459
    %v465 = vmul.f32 1.0, %v464
    %v466 = vmul.f32 %v445, %v110
    %v467 = vmul.f32 %v426, %v446
    %v468 = vadd.f32 %v466, %v467
    %v469 = vtanh.pop %v468
    %v470 = vmul.f32 %v465, %v469
    %472 = vset.pattern.permute.xlu0 0
    %473 = vperm.xlu0 %472, %v67
    %v474 = vpop.permute.xlu0 %473
    %v476 = vmul.f32 %v474, %v126
    %v477 = vmul.f32 %v474, %v127
    %v478 = vmul.f32 %v474, %v128
    %v479 = vmul.f32 %v474, %v129
    %v480 = vadd.f32 %v135, %v476
    %v481 = vadd.f32 %v136, %v477
    %v482 = vadd.f32 %v137, %v478
    %v483 = vadd.f32 %v138, %v479
    %484 = vset.pattern.permute.xlu0 1
    %485 = vperm.xlu0 %484, %v67
    %v486 = vpop.permute.xlu0 %485
    %v488 = vmul.f32 %v486, %v159
    %v489 = vmul.f32 %v486, %v160
    %v490 = vmul.f32 %v486, %v161
    %v491 = vmul.f32 %v486, %v162
    %v492 = vadd.f32 %v480, %v488
    %v493 = vadd.f32 %v481, %v489
    %v494 = vadd.f32 %v482, %v490
    %v495 = vadd.f32 %v483, %v491
    %496 = vset.pattern.permute.xlu0 2
    %497 = vperm.xlu0 %496, %v67
    %v498 = vpop.permute.xlu0 %497
    %v500 = vmul.f32 %v498, %v183
    %v501 = vmul.f32 %v498, %v184
    %v502 = vmul.f32 %v498, %v185
    %v503 = vmul.f32 %v498, %v186
    %v504 = vadd.f32 %v492, %v500
    %v505 = vadd.f32 %v493, %v501
    %v506 = vadd.f32 %v494, %v502
    %v507 = vadd.f32 %v495, %v503
    %v508 = vpack.c.bf16 %v470, %v470
    %509 = vmatpush.bf16.msra.mxu0 %v320
    %510 = vmatpush.bf16.msra.mxu0 %v316
    %511 = vmatpush.bf16.msra.mxu0 %v312
    %512 = vmatpush.bf16.msra.mxu0 %v308
    %513 = vmatpush.bf16.msra.mxu0 %v304
    %514 = vmatpush.bf16.msra.mxu0 %v300
    %515 = vmatpush.bf16.msra.mxu0 %v296
    %516 = vmatpush.bf16.msra.mxu0 %v292
    %517 = vmatmul.bf16.gmra.mxu0 %v508
    %v518 = vpop.f32.mrf.mxu0
    %v519 = vadd.f32 %v504, %v518
    %v520 = vpop.f32.mrf.mxu0
    %521 = vdwg.mxu0
    %522 = vmatpush.bf16.msra.mxu0 %v321
    %523 = vmatpush.bf16.msra.mxu0 %v317
    %524 = vmatpush.bf16.msra.mxu0 %v313
    %525 = vmatpush.bf16.msra.mxu0 %v309
    %526 = vmatpush.bf16.msra.mxu0 %v305
    %527 = vmatpush.bf16.msra.mxu0 %v301
    %528 = vmatpush.bf16.msra.mxu0 %v297
    %529 = vmatpush.bf16.msra.mxu0 %v293
    %530 = vmatmul.bf16.gmra.mxu0 %v508
    %v531 = vpop.f32.mrf.mxu0
    %v532 = vadd.f32 %v505, %v531
    %v533 = vpop.f32.mrf.mxu0
    %534 = vdwg.mxu0
    %535 = vmatpush.bf16.msra.mxu0 %v322
    %536 = vmatpush.bf16.msra.mxu0 %v318
    %537 = vmatpush.bf16.msra.mxu0 %v314
    %538 = vmatpush.bf16.msra.mxu0 %v310
    %539 = vmatpush.bf16.msra.mxu0 %v306
    %540 = vmatpush.bf16.msra.mxu0 %v302
    %541 = vmatpush.bf16.msra.mxu0 %v298
    %542 = vmatpush.bf16.msra.mxu0 %v294
    %543 = vmatmul.bf16.gmra.mxu0 %v508
    %v544 = vpop.f32.mrf.mxu0
    %v545 = vadd.f32 %v506, %v544
    %v546 = vpop.f32.mrf.mxu0
    %547 = vdwg.mxu0
    %548 = vmatpush.bf16.msra.mxu0 %v323
    %549 = vmatpush.bf16.msra.mxu0 %v319
    %550 = vmatpush.bf16.msra.mxu0 %v315
    %551 = vmatpush.bf16.msra.mxu0 %v311
    %552 = vmatpush.bf16.msra.mxu0 %v307
    %553 = vmatpush.bf16.msra.mxu0 %v303
    %554 = vmatpush.bf16.msra.mxu0 %v299
    %555 = vmatpush.bf16.msra.mxu0 %v295
    %556 = vmatmul.bf16.gmra.mxu0 %v508
    %v557 = vpop.f32.mrf.mxu0
    %v558 = vadd.f32 %v507, %v557
    %v559 = vpop.f32.mrf.mxu0
    %560 = vdwg.mxu0
    %v561 = vxor.u32 %v519, 2147483648
    %v562 = vmul.f32 %v561, 1.442695
    %v563 = vpow.pop %v562
    %v564 = vadd.f32 %v563, 1.0
    %v565 = vrcp.pop %v564
    %v566 = vmul.f32 %v564, %v565
    %v567 = vsub.f32 1.0, %v566
    %v568 = vmul.f32 %v565, %v567
    %v569 = vadd.f32 %v565, %v568
    %vm570 = vweird.f32 %v564
    %vm571 = vweird.f32 %v565
    %vm572 = vmor %vm570, %vm571
    %v573 = vsel %vm572, %v565, %v569
    %v574 = vand.u32 2147483647, %v564
    %vm575 = vcmp.eq.f32.partialorder %v574, 8.507059e+37
    %v576 = vand.u32 %v564, 2147483648
    %v577 = vor.u32 1.1754944e-38, %v576
    %v578 = vsel %vm575, %v577, %v573
    %v579 = vmul.f32 1.0, %v578
    %v580 = vxor.u32 %v532, 2147483648
    %v581 = vmul.f32 %v580, 1.442695
    %v582 = vpow.pop %v581
    %v583 = vadd.f32 %v582, 1.0
    %v584 = vrcp.pop %v583
    %v585 = vmul.f32 %v583, %v584
    %v586 = vsub.f32 1.0, %v585
    %v587 = vmul.f32 %v584, %v586
    %v588 = vadd.f32 %v584, %v587
    %vm589 = vweird.f32 %v583
    %vm590 = vweird.f32 %v584
    %vm591 = vmor %vm589, %vm590
    %v592 = vsel %vm591, %v584, %v588
    %v593 = vand.u32 2147483647, %v583
    %vm594 = vcmp.eq.f32.partialorder %v593, 8.507059e+37
    %v595 = vand.u32 %v583, 2147483648
    %v596 = vor.u32 1.1754944e-38, %v595
    %v597 = vsel %vm594, %v596, %v592
    %v598 = vmul.f32 1.0, %v597
    %v599 = vtanh.pop %v545
    %v600 = vxor.u32 %v558, 2147483648
    %v601 = vmul.f32 %v600, 1.442695
    %v602 = vpow.pop %v601
    %v603 = vadd.f32 %v602, 1.0
    %v604 = vrcp.pop %v603
    %v605 = vmul.f32 %v603, %v604
    %v606 = vsub.f32 1.0, %v605
    %v607 = vmul.f32 %v604, %v606
    %v608 = vadd.f32 %v604, %v607
    %vm609 = vweird.f32 %v603
    %vm610 = vweird.f32 %v604
    %vm611 = vmor %vm609, %vm610
    %v612 = vsel %vm611, %v604, %v608
    %v613 = vand.u32 2147483647, %v603
    %vm614 = vcmp.eq.f32.partialorder %v613, 8.507059e+37
    %v615 = vand.u32 %v603, 2147483648
    %v616 = vor.u32 1.1754944e-38, %v615
    %v617 = vsel %vm614, %v616, %v612
    %v618 = vmul.f32 1.0, %v617
    %v619 = vmul.f32 %v598, %v468
    %v620 = vmul.f32 %v579, %v599
    %v621 = vadd.f32 %v619, %v620
    %v622 = vtanh.pop %v621
    %v623 = vmul.f32 %v618, %v622
    %625 = vset.pattern.permute.xlu0 0
    %626 = vperm.xlu0 %625, %v68
    %v627 = vpop.permute.xlu0 %626
    %v629 = vmul.f32 %v627, %v126
    %v630 = vmul.f32 %v627, %v127
    %v631 = vmul.f32 %v627, %v128
    %v632 = vmul.f32 %v627, %v129
    %v633 = vadd.f32 %v135, %v629
    %v634 = vadd.f32 %v136, %v630
    %v635 = vadd.f32 %v137, %v631
    %v636 = vadd.f32 %v138, %v632
    %637 = vset.pattern.permute.xlu0 1
    %638 = vperm.xlu0 %637, %v68
    %v639 = vpop.permute.xlu0 %638
    %v641 = vmul.f32 %v639, %v159
    %v642 = vmul.f32 %v639, %v160
    %v643 = vmul.f32 %v639, %v161
    %v644 = vmul.f32 %v639, %v162
    %v645 = vadd.f32 %v633, %v641
    %v646 = vadd.f32 %v634, %v642
    %v647 = vadd.f32 %v635, %v643
    %v648 = vadd.f32 %v636, %v644
    %649 = vset.pattern.permute.xlu0 2
    %650 = vperm.xlu0 %649, %v68
    %v651 = vpop.permute.xlu0 %650
    %v653 = vmul.f32 %v651, %v183
    %v654 = vmul.f32 %v651, %v184
    %v655 = vmul.f32 %v651, %v185
    %v656 = vmul.f32 %v651, %v186
    %v657 = vadd.f32 %v645, %v653
    %v658 = vadd.f32 %v646, %v654
    %v659 = vadd.f32 %v647, %v655
    %v660 = vadd.f32 %v648, %v656
    %v661 = vpack.c.bf16 %v623, %v623
    %662 = vmatpush.bf16.msra.mxu0 %v320
    %663 = vmatpush.bf16.msra.mxu0 %v316
    %664 = vmatpush.bf16.msra.mxu0 %v312
    %665 = vmatpush.bf16.msra.mxu0 %v308
    %666 = vmatpush.bf16.msra.mxu0 %v304
    %667 = vmatpush.bf16.msra.mxu0 %v300
    %668 = vmatpush.bf16.msra.mxu0 %v296
    %669 = vmatpush.bf16.msra.mxu0 %v292
    %670 = vmatmul.bf16.gmra.mxu0 %v661
    %v671 = vpop.f32.mrf.mxu0
    %v672 = vadd.f32 %v657, %v671
    %v673 = vpop.f32.mrf.mxu0
    %674 = vdwg.mxu0
    %675 = vmatpush.bf16.msra.mxu0 %v321
    %676 = vmatpush.bf16.msra.mxu0 %v317
    %677 = vmatpush.bf16.msra.mxu0 %v313
    %678 = vmatpush.bf16.msra.mxu0 %v309
    %679 = vmatpush.bf16.msra.mxu0 %v305
    %680 = vmatpush.bf16.msra.mxu0 %v301
    %681 = vmatpush.bf16.msra.mxu0 %v297
    %682 = vmatpush.bf16.msra.mxu0 %v293
    %683 = vmatmul.bf16.gmra.mxu0 %v661
    %v684 = vpop.f32.mrf.mxu0
    %v685 = vadd.f32 %v658, %v684
    %v686 = vpop.f32.mrf.mxu0
    %687 = vdwg.mxu0
    %688 = vmatpush.bf16.msra.mxu0 %v322
    %689 = vmatpush.bf16.msra.mxu0 %v318
    %690 = vmatpush.bf16.msra.mxu0 %v314
    %691 = vmatpush.bf16.msra.mxu0 %v310
    %692 = vmatpush.bf16.msra.mxu0 %v306
    %693 = vmatpush.bf16.msra.mxu0 %v302
    %694 = vmatpush.bf16.msra.mxu0 %v298
    %695 = vmatpush.bf16.msra.mxu0 %v294
    %696 = vmatmul.bf16.gmra.mxu0 %v661
    %v697 = vpop.f32.mrf.mxu0
    %v698 = vadd.f32 %v659, %v697
    %v699 = vpop.f32.mrf.mxu0
    %700 = vdwg.mxu0
    %701 = vmatpush.bf16.msra.mxu0 %v323
    %702 = vmatpush.bf16.msra.mxu0 %v319
    %703 = vmatpush.bf16.msra.mxu0 %v315
    %704 = vmatpush.bf16.msra.mxu0 %v311
    %705 = vmatpush.bf16.msra.mxu0 %v307
    %706 = vmatpush.bf16.msra.mxu0 %v303
    %707 = vmatpush.bf16.msra.mxu0 %v299
    %708 = vmatpush.bf16.msra.mxu0 %v295
    %709 = vmatmul.bf16.gmra.mxu0 %v661
    %v710 = vpop.f32.mrf.mxu0
    %v711 = vadd.f32 %v660, %v710
    %v712 = vpop.f32.mrf.mxu0
    %713 = vdwg.mxu0
    %v714 = vxor.u32 %v672, 2147483648
    %v715 = vmul.f32 %v714, 1.442695
    %v716 = vpow.pop %v715
    %v717 = vadd.f32 %v716, 1.0
    %v718 = vrcp.pop %v717
    %v719 = vmul.f32 %v717, %v718
    %v720 = vsub.f32 1.0, %v719
    %v721 = vmul.f32 %v718, %v720
    %v722 = vadd.f32 %v718, %v721
    %vm723 = vweird.f32 %v717
    %vm724 = vweird.f32 %v718
    %vm725 = vmor %vm723, %vm724
    %v726 = vsel %vm725, %v718, %v722
    %v727 = vand.u32 2147483647, %v717
    %vm728 = vcmp.eq.f32.partialorder %v727, 8.507059e+37
    %v729 = vand.u32 %v717, 2147483648
    %v730 = vor.u32 1.1754944e-38, %v729
    %v731 = vsel %vm728, %v730, %v726
    %v732 = vmul.f32 1.0, %v731
    %v733 = vxor.u32 %v685, 2147483648
    %v734 = vmul.f32 %v733, 1.442695
    %v735 = vpow.pop %v734
    %v736 = vadd.f32 %v735, 1.0
    %v737 = vrcp.pop %v736
    %v738 = vmul.f32 %v736, %v737
    %v739 = vsub.f32 1.0, %v738
    %v740 = vmul.f32 %v737, %v739
    %v741 = vadd.f32 %v737, %v740
    %vm742 = vweird.f32 %v736
    %vm743 = vweird.f32 %v737
    %vm744 = vmor %vm742, %vm743
    %v745 = vsel %vm744, %v737, %v741
    %v746 = vand.u32 2147483647, %v736
    %vm747 = vcmp.eq.f32.partialorder %v746, 8.507059e+37
    %v748 = vand.u32 %v736, 2147483648
    %v749 = vor.u32 1.1754944e-38, %v748
    %v750 = vsel %vm747, %v749, %v745
    %v751 = vmul.f32 1.0, %v750
    %v752 = vtanh.pop %v698
    %v753 = vxor.u32 %v711, 2147483648
    %v754 = vmul.f32 %v753, 1.442695
    %v755 = vpow.pop %v754
    %v756 = vadd.f32 %v755, 1.0
    %v757 = vrcp.pop %v756
    %v758 = vmul.f32 %v756, %v757
    %v759 = vsub.f32 1.0, %v758
    %v760 = vmul.f32 %v757, %v759
    %v761 = vadd.f32 %v757, %v760
    %vm762 = vweird.f32 %v756
    %vm763 = vweird.f32 %v757
    %vm764 = vmor %vm762, %vm763
    %v765 = vsel %vm764, %v757, %v761
    %v766 = vand.u32 2147483647, %v756
    %vm767 = vcmp.eq.f32.partialorder %v766, 8.507059e+37
    %v768 = vand.u32 %v756, 2147483648
    %v769 = vor.u32 1.1754944e-38, %v768
    %v770 = vsel %vm767, %v769, %v765
    %v771 = vmul.f32 1.0, %v770
    %v772 = vmul.f32 %v751, %v621
    %v773 = vmul.f32 %v732, %v752
    %v774 = vadd.f32 %v772, %v773
    %v775 = vtanh.pop %v774
    %v776 = vmul.f32 %v771, %v775
    %778 = vset.pattern.permute.xlu0 0
    %779 = vperm.xlu0 %778, %v69
    %v780 = vpop.permute.xlu0 %779
    %v782 = vmul.f32 %v780, %v126
    %v783 = vmul.f32 %v780, %v127
    %v784 = vmul.f32 %v780, %v128
    %v785 = vmul.f32 %v780, %v129
    %v786 = vadd.f32 %v135, %v782
    %v787 = vadd.f32 %v136, %v783
    %v788 = vadd.f32 %v137, %v784
    %v789 = vadd.f32 %v138, %v785
    %790 = vset.pattern.permute.xlu0 1
    %791 = vperm.xlu0 %790, %v69
    %v792 = vpop.permute.xlu0 %791
    %v794 = vmul.f32 %v792, %v159
    %v795 = vmul.f32 %v792, %v160
    %v796 = vmul.f32 %v792, %v161
    %v797 = vmul.f32 %v792, %v162
    %v798 = vadd.f32 %v786, %v794
    %v799 = vadd.f32 %v787, %v795
    %v800 = vadd.f32 %v788, %v796
    %v801 = vadd.f32 %v789, %v797
    %802 = vset.pattern.permute.xlu0 2
    %803 = vperm.xlu0 %802, %v69
    %v804 = vpop.permute.xlu0 %803
    %v806 = vmul.f32 %v804, %v183
    %v807 = vmul.f32 %v804, %v184
    %v808 = vmul.f32 %v804, %v185
    %v809 = vmul.f32 %v804, %v186
    %v810 = vadd.f32 %v798, %v806
    %v811 = vadd.f32 %v799, %v807
    %v812 = vadd.f32 %v800, %v808
    %v813 = vadd.f32 %v801, %v809
    %v814 = vpack.c.bf16 %v776, %v776
    %815 = vmatpush.bf16.msra.mxu0 %v320
    %816 = vmatpush.bf16.msra.mxu0 %v316
    %817 = vmatpush.bf16.msra.mxu0 %v312
    %818 = vmatpush.bf16.msra.mxu0 %v308
    %819 = vmatpush.bf16.msra.mxu0 %v304
    %820 = vmatpush.bf16.msra.mxu0 %v300
    %821 = vmatpush.bf16.msra.mxu0 %v296
    %822 = vmatpush.bf16.msra.mxu0 %v292
    %823 = vmatmul.bf16.gmra.mxu0 %v814
    %v824 = vpop.f32.mrf.mxu0
    %v825 = vadd.f32 %v810, %v824
    %v826 = vpop.f32.mrf.mxu0
    %827 = vdwg.mxu0
    %828 = vmatpush.bf16.msra.mxu0 %v321
    %829 = vmatpush.bf16.msra.mxu0 %v317
    %830 = vmatpush.bf16.msra.mxu0 %v313
    %831 = vmatpush.bf16.msra.mxu0 %v309
    %832 = vmatpush.bf16.msra.mxu0 %v305
    %833 = vmatpush.bf16.msra.mxu0 %v301
    %834 = vmatpush.bf16.msra.mxu0 %v297
    %835 = vmatpush.bf16.msra.mxu0 %v293
    %836 = vmatmul.bf16.gmra.mxu0 %v814
    %v837 = vpop.f32.mrf.mxu0
    %v838 = vadd.f32 %v811, %v837
    %v839 = vpop.f32.mrf.mxu0
    %840 = vdwg.mxu0
    %841 = vmatpush.bf16.msra.mxu0 %v322
    %842 = vmatpush.bf16.msra.mxu0 %v318
    %843 = vmatpush.bf16.msra.mxu0 %v314
    %844 = vmatpush.bf16.msra.mxu0 %v310
    %845 = vmatpush.bf16.msra.mxu0 %v306
    %846 = vmatpush.bf16.msra.mxu0 %v302
    %847 = vmatpush.bf16.msra.mxu0 %v298
    %848 = vmatpush.bf16.msra.mxu0 %v294
    %849 = vmatmul.bf16.gmra.mxu0 %v814
    %v850 = vpop.f32.mrf.mxu0
    %v851 = vadd.f32 %v812, %v850
    %v852 = vpop.f32.mrf.mxu0
    %853 = vdwg.mxu0
    %854 = vmatpush.bf16.msra.mxu0 %v323
    %855 = vmatpush.bf16.msra.mxu0 %v319
    %856 = vmatpush.bf16.msra.mxu0 %v315
    %857 = vmatpush.bf16.msra.mxu0 %v311
    %858 = vmatpush.bf16.msra.mxu0 %v307
    %859 = vmatpush.bf16.msra.mxu0 %v303
    %860 = vmatpush.bf16.msra.mxu0 %v299
    %861 = vmatpush.bf16.msra.mxu0 %v295
    %862 = vmatmul.bf16.gmra.mxu0 %v814
    %v863 = vpop.f32.mrf.mxu0
    %v864 = vadd.f32 %v813, %v863
    %v865 = vpop.f32.mrf.mxu0
    %866 = vdwg.mxu0
    %v867 = vxor.u32 %v825, 2147483648
    %v868 = vmul.f32 %v867, 1.442695
    %v869 = vpow.pop %v868
    %v870 = vadd.f32 %v869, 1.0
    %v871 = vrcp.pop %v870
    %v872 = vmul.f32 %v870, %v871
    %v873 = vsub.f32 1.0, %v872
    %v874 = vmul.f32 %v871, %v873
    %v875 = vadd.f32 %v871, %v874
    %vm876 = vweird.f32 %v870
    %vm877 = vweird.f32 %v871
    %vm878 = vmor %vm876, %vm877
    %v879 = vsel %vm878, %v871, %v875
    %v880 = vand.u32 2147483647, %v870
    %vm881 = vcmp.eq.f32.partialorder %v880, 8.507059e+37
    %v882 = vand.u32 %v870, 2147483648
    %v883 = vor.u32 1.1754944e-38, %v882
    %v884 = vsel %vm881, %v883, %v879
    %v885 = vmul.f32 1.0, %v884
    %v886 = vxor.u32 %v838, 2147483648
    %v887 = vmul.f32 %v886, 1.442695
    %v888 = vpow.pop %v887
    %v889 = vadd.f32 %v888, 1.0
    %v890 = vrcp.pop %v889
    %v891 = vmul.f32 %v889, %v890
    %v892 = vsub.f32 1.0, %v891
    %v893 = vmul.f32 %v890, %v892
    %v894 = vadd.f32 %v890, %v893
    %vm895 = vweird.f32 %v889
    %vm896 = vweird.f32 %v890
    %vm897 = vmor %vm895, %vm896
    %v898 = vsel %vm897, %v890, %v894
    %v899 = vand.u32 2147483647, %v889
    %vm900 = vcmp.eq.f32.partialorder %v899, 8.507059e+37
    %v901 = vand.u32 %v889, 2147483648
    %v902 = vor.u32 1.1754944e-38, %v901
    %v903 = vsel %vm900, %v902, %v898
    %v904 = vmul.f32 1.0, %v903
    %v905 = vtanh.pop %v851
    %v906 = vxor.u32 %v864, 2147483648
    %v907 = vmul.f32 %v906, 1.442695
    %v908 = vpow.pop %v907
    %v909 = vadd.f32 %v908, 1.0
    %v910 = vrcp.pop %v909
    %v911 = vmul.f32 %v909, %v910
    %v912 = vsub.f32 1.0, %v911
    %v913 = vmul.f32 %v910, %v912
    %v914 = vadd.f32 %v910, %v913
    %vm915 = vweird.f32 %v909
    %vm916 = vweird.f32 %v910
    %vm917 = vmor %vm915, %vm916
    %v918 = vsel %vm917, %v910, %v914
    %v919 = vand.u32 2147483647, %v909
    %vm920 = vcmp.eq.f32.partialorder %v919, 8.507059e+37
    %v921 = vand.u32 %v909, 2147483648
    %v922 = vor.u32 1.1754944e-38, %v921
    %v923 = vsel %vm920, %v922, %v918
    %v924 = vmul.f32 1.0, %v923
    %v925 = vmul.f32 %v904, %v774
    %v926 = vmul.f32 %v885, %v905
    %v927 = vadd.f32 %v925, %v926
    %v928 = vtanh.pop %v927
    %v929 = vmul.f32 %v924, %v928
    %931 = vset.pattern.permute.xlu0 0
    %932 = vperm.xlu0 %931, %v70
    %v933 = vpop.permute.xlu0 %932
    %v935 = vmul.f32 %v933, %v126
    %v936 = vmul.f32 %v933, %v127
    %v937 = vmul.f32 %v933, %v128
    %v938 = vmul.f32 %v933, %v129
    %v939 = vadd.f32 %v135, %v935
    %v940 = vadd.f32 %v136, %v936
    %v941 = vadd.f32 %v137, %v937
    %v942 = vadd.f32 %v138, %v938
    %943 = vset.pattern.permute.xlu0 1
    %944 = vperm.xlu0 %943, %v70
    %v945 = vpop.permute.xlu0 %944
    %v947 = vmul.f32 %v945, %v159
    %v948 = vmul.f32 %v945, %v160
    %v949 = vmul.f32 %v945, %v161
    %v950 = vmul.f32 %v945, %v162
    %v951 = vadd.f32 %v939, %v947
    %v952 = vadd.f32 %v940, %v948
    %v953 = vadd.f32 %v941, %v949
    %v954 = vadd.f32 %v942, %v950
    %955 = vset.pattern.permute.xlu0 2
    %956 = vperm.xlu0 %955, %v70
    %v957 = vpop.permute.xlu0 %956
    %v959 = vmul.f32 %v957, %v183
    %v960 = vmul.f32 %v957, %v184
    %v961 = vmul.f32 %v957, %v185
    %v962 = vmul.f32 %v957, %v186
    %v963 = vadd.f32 %v951, %v959
    %v964 = vadd.f32 %v952, %v960
    %v965 = vadd.f32 %v953, %v961
    %v966 = vadd.f32 %v954, %v962
    %v967 = vpack.c.bf16 %v929, %v929
    %968 = vmatpush.bf16.msra.mxu0 %v320
    %969 = vmatpush.bf16.msra.mxu0 %v316
    %970 = vmatpush.bf16.msra.mxu0 %v312
    %971 = vmatpush.bf16.msra.mxu0 %v308
    %972 = vmatpush.bf16.msra.mxu0 %v304
    %973 = vmatpush.bf16.msra.mxu0 %v300
    %974 = vmatpush.bf16.msra.mxu0 %v296
    %975 = vmatpush.bf16.msra.mxu0 %v292
    %976 = vmatmul.bf16.gmra.mxu0 %v967
    %v977 = vpop.f32.mrf.mxu0
    %v978 = vadd.f32 %v963, %v977
    %v979 = vpop.f32.mrf.mxu0
    %980 = vdwg.mxu0
    %981 = vmatpush.bf16.msra.mxu0 %v321
    %982 = vmatpush.bf16.msra.mxu0 %v317
    %983 = vmatpush.bf16.msra.mxu0 %v313
    %984 = vmatpush.bf16.msra.mxu0 %v309
    %985 = vmatpush.bf16.msra.mxu0 %v305
    %986 = vmatpush.bf16.msra.mxu0 %v301
    %987 = vmatpush.bf16.msra.mxu0 %v297
    %988 = vmatpush.bf16.msra.mxu0 %v293
    %989 = vmatmul.bf16.gmra.mxu0 %v967
    %v990 = vpop.f32.mrf.mxu0
    %v991 = vadd.f32 %v964, %v990
    %v992 = vpop.f32.mrf.mxu0
    %993 = vdwg.mxu0
    %994 = vmatpush.bf16.msra.mxu0 %v322
    %995 = vmatpush.bf16.msra.mxu0 %v318
    %996 = vmatpush.bf16.msra.mxu0 %v314
    %997 = vmatpush.bf16.msra.mxu0 %v310
    %998 = vmatpush.bf16.msra.mxu0 %v306
    %999 = vmatpush.bf16.msra.mxu0 %v302
    %1000 = vmatpush.bf16.msra.mxu0 %v298
    %1001 = vmatpush.bf16.msra.mxu0 %v294
    %1002 = vmatmul.bf16.gmra.mxu0 %v967
    %v1003 = vpop.f32.mrf.mxu0
    %v1004 = vadd.f32 %v965, %v1003
    %v1005 = vpop.f32.mrf.mxu0
    %1006 = vdwg.mxu0
    %1007 = vmatpush.bf16.msra.mxu0 %v323
    %1008 = vmatpush.bf16.msra.mxu0 %v319
    %1009 = vmatpush.bf16.msra.mxu0 %v315
    %1010 = vmatpush.bf16.msra.mxu0 %v311
    %1011 = vmatpush.bf16.msra.mxu0 %v307
    %1012 = vmatpush.bf16.msra.mxu0 %v303
    %1013 = vmatpush.bf16.msra.mxu0 %v299
    %1014 = vmatpush.bf16.msra.mxu0 %v295
    %1015 = vmatmul.bf16.gmra.mxu0 %v967
    %v1016 = vpop.f32.mrf.mxu0
    %v1017 = vadd.f32 %v966, %v1016
    %v1018 = vpop.f32.mrf.mxu0
    %1019 = vdwg.mxu0
    %v1020 = vxor.u32 %v978, 2147483648
    %v1021 = vmul.f32 %v1020, 1.442695
    %v1022 = vpow.pop %v1021
    %v1023 = vadd.f32 %v1022, 1.0
    %v1024 = vrcp.pop %v1023
    %v1025 = vmul.f32 %v1023, %v1024
    %v1026 = vsub.f32 1.0, %v1025
    %v1027 = vmul.f32 %v1024, %v1026
    %v1028 = vadd.f32 %v1024, %v1027
    %vm1029 = vweird.f32 %v1023
    %vm1030 = vweird.f32 %v1024
    %vm1031 = vmor %vm1029, %vm1030
    %v1032 = vsel %vm1031, %v1024, %v1028
    %v1033 = vand.u32 2147483647, %v1023
    %vm1034 = vcmp.eq.f32.partialorder %v1033, 8.507059e+37
    %v1035 = vand.u32 %v1023, 2147483648
    %v1036 = vor.u32 1.1754944e-38, %v1035
    %v1037 = vsel %vm1034, %v1036, %v1032
    %v1038 = vmul.f32 1.0, %v1037
    %v1039 = vxor.u32 %v991, 2147483648
    %v1040 = vmul.f32 %v1039, 1.442695
    %v1041 = vpow.pop %v1040
    %v1042 = vadd.f32 %v1041, 1.0
    %v1043 = vrcp.pop %v1042
    %v1044 = vmul.f32 %v1042, %v1043
    %v1045 = vsub.f32 1.0, %v1044
    %v1046 = vmul.f32 %v1043, %v1045
    %v1047 = vadd.f32 %v1043, %v1046
    %vm1048 = vweird.f32 %v1042
    %vm1049 = vweird.f32 %v1043
    %vm1050 = vmor %vm1048, %vm1049
    %v1051 = vsel %vm1050, %v1043, %v1047
    %v1052 = vand.u32 2147483647, %v1042
    %vm1053 = vcmp.eq.f32.partialorder %v1052, 8.507059e+37
    %v1054 = vand.u32 %v1042, 2147483648
    %v1055 = vor.u32 1.1754944e-38, %v1054
    %v1056 = vsel %vm1053, %v1055, %v1051
    %v1057 = vmul.f32 1.0, %v1056
    %v1058 = vtanh.pop %v1004
    %v1059 = vxor.u32 %v1017, 2147483648
    %v1060 = vmul.f32 %v1059, 1.442695
    %v1061 = vpow.pop %v1060
    %v1062 = vadd.f32 %v1061, 1.0
    %v1063 = vrcp.pop %v1062
    %v1064 = vmul.f32 %v1062, %v1063
    %v1065 = vsub.f32 1.0, %v1064
    %v1066 = vmul.f32 %v1063, %v1065
    %v1067 = vadd.f32 %v1063, %v1066
    %vm1068 = vweird.f32 %v1062
    %vm1069 = vweird.f32 %v1063
    %vm1070 = vmor %vm1068, %vm1069
    %v1071 = vsel %vm1070, %v1063, %v1067
    %v1072 = vand.u32 2147483647, %v1062
    %vm1073 = vcmp.eq.f32.partialorder %v1072, 8.507059e+37
    %v1074 = vand.u32 %v1062, 2147483648
    %v1075 = vor.u32 1.1754944e-38, %v1074
    %v1076 = vsel %vm1073, %v1075, %v1071
    %v1077 = vmul.f32 1.0, %v1076
    %v1078 = vmul.f32 %v1057, %v927
    %v1079 = vmul.f32 %v1038, %v1058
    %v1080 = vadd.f32 %v1078, %v1079
    %v1081 = vtanh.pop %v1080
    %v1082 = vmul.f32 %v1077, %v1081
    %1084 = vset.pattern.permute.xlu0 0
    %1085 = vperm.xlu0 %1084, %v71
    %v1086 = vpop.permute.xlu0 %1085
    %v1088 = vmul.f32 %v1086, %v126
    %v1089 = vmul.f32 %v1086, %v127
    %v1090 = vmul.f32 %v1086, %v128
    %v1091 = vmul.f32 %v1086, %v129
    %v1092 = vadd.f32 %v135, %v1088
    %v1093 = vadd.f32 %v136, %v1089
    %v1094 = vadd.f32 %v137, %v1090
    %v1095 = vadd.f32 %v138, %v1091
    %1096 = vset.pattern.permute.xlu0 1
    %1097 = vperm.xlu0 %1096, %v71
    %v1098 = vpop.permute.xlu0 %1097
    %v1100 = vmul.f32 %v1098, %v159
    %v1101 = vmul.f32 %v1098, %v160
    %v1102 = vmul.f32 %v1098, %v161
    %v1103 = vmul.f32 %v1098, %v162
    %v1104 = vadd.f32 %v1092, %v1100
    %v1105 = vadd.f32 %v1093, %v1101
    %v1106 = vadd.f32 %v1094, %v1102
    %v1107 = vadd.f32 %v1095, %v1103
    %1108 = vset.pattern.permute.xlu0 2
    %1109 = vperm.xlu0 %1108, %v71
    %v1110 = vpop.permute.xlu0 %1109
    %v1112 = vmul.f32 %v1110, %v183
    %v1113 = vmul.f32 %v1110, %v184
    %v1114 = vmul.f32 %v1110, %v185
    %v1115 = vmul.f32 %v1110, %v186
    %v1116 = vadd.f32 %v1104, %v1112
    %v1117 = vadd.f32 %v1105, %v1113
    %v1118 = vadd.f32 %v1106, %v1114
    %v1119 = vadd.f32 %v1107, %v1115
    %v1120 = vpack.c.bf16 %v1082, %v1082
    %1121 = vmatpush.bf16.msra.mxu0 %v320
    %1122 = vmatpush.bf16.msra.mxu0 %v316
    %1123 = vmatpush.bf16.msra.mxu0 %v312
    %1124 = vmatpush.bf16.msra.mxu0 %v308
    %1125 = vmatpush.bf16.msra.mxu0 %v304
    %1126 = vmatpush.bf16.msra.mxu0 %v300
    %1127 = vmatpush.bf16.msra.mxu0 %v296
    %1128 = vmatpush.bf16.msra.mxu0 %v292
    %1129 = vmatmul.bf16.gmra.mxu0 %v1120
    %v1130 = vpop.f32.mrf.mxu0
    %v1131 = vadd.f32 %v1116, %v1130
    %v1132 = vpop.f32.mrf.mxu0
    %1133 = vdwg.mxu0
    %1134 = vmatpush.bf16.msra.mxu0 %v321
    %1135 = vmatpush.bf16.msra.mxu0 %v317
    %1136 = vmatpush.bf16.msra.mxu0 %v313
    %1137 = vmatpush.bf16.msra.mxu0 %v309
    %1138 = vmatpush.bf16.msra.mxu0 %v305
    %1139 = vmatpush.bf16.msra.mxu0 %v301
    %1140 = vmatpush.bf16.msra.mxu0 %v297
    %1141 = vmatpush.bf16.msra.mxu0 %v293
    %1142 = vmatmul.bf16.gmra.mxu0 %v1120
    %v1143 = vpop.f32.mrf.mxu0
    %v1144 = vadd.f32 %v1117, %v1143
    %v1145 = vpop.f32.mrf.mxu0
    %1146 = vdwg.mxu0
    %1147 = vmatpush.bf16.msra.mxu0 %v322
    %1148 = vmatpush.bf16.msra.mxu0 %v318
    %1149 = vmatpush.bf16.msra.mxu0 %v314
    %1150 = vmatpush.bf16.msra.mxu0 %v310
    %1151 = vmatpush.bf16.msra.mxu0 %v306
    %1152 = vmatpush.bf16.msra.mxu0 %v302
    %1153 = vmatpush.bf16.msra.mxu0 %v298
    %1154 = vmatpush.bf16.msra.mxu0 %v294
    %1155 = vmatmul.bf16.gmra.mxu0 %v1120
    %v1156 = vpop.f32.mrf.mxu0
    %v1157 = vadd.f32 %v1118, %v1156
    %v1158 = vpop.f32.mrf.mxu0
    %1159 = vdwg.mxu0
    %1160 = vmatpush.bf16.msra.mxu0 %v323
    %1161 = vmatpush.bf16.msra.mxu0 %v319
    %1162 = vmatpush.bf16.msra.mxu0 %v315
    %1163 = vmatpush.bf16.msra.mxu0 %v311
    %1164 = vmatpush.bf16.msra.mxu0 %v307
    %1165 = vmatpush.bf16.msra.mxu0 %v303
    %1166 = vmatpush.bf16.msra.mxu0 %v299
    %1167 = vmatpush.bf16.msra.mxu0 %v295
    %1168 = vmatmul.bf16.gmra.mxu0 %v1120
    %v1169 = vpop.f32.mrf.mxu0
    %v1170 = vadd.f32 %v1119, %v1169
    %v1171 = vpop.f32.mrf.mxu0
    %1172 = vdwg.mxu0
    %v1173 = vxor.u32 %v1131, 2147483648
    %v1174 = vmul.f32 %v1173, 1.442695
    %v1175 = vpow.pop %v1174
    %v1176 = vadd.f32 %v1175, 1.0
    %v1177 = vrcp.pop %v1176
    %v1178 = vmul.f32 %v1176, %v1177
    %v1179 = vsub.f32 1.0, %v1178
    %v1180 = vmul.f32 %v1177, %v1179
    %v1181 = vadd.f32 %v1177, %v1180
    %vm1182 = vweird.f32 %v1176
    %vm1183 = vweird.f32 %v1177
    %vm1184 = vmor %vm1182, %vm1183
    %v1185 = vsel %vm1184, %v1177, %v1181
    %v1186 = vand.u32 2147483647, %v1176
    %vm1187 = vcmp.eq.f32.partialorder %v1186, 8.507059e+37
    %v1188 = vand.u32 %v1176, 2147483648
    %v1189 = vor.u32 1.1754944e-38, %v1188
    %v1190 = vsel %vm1187, %v1189, %v1185
    %v1191 = vmul.f32 1.0, %v1190
    %v1192 = vxor.u32 %v1144, 2147483648
    %v1193 = vmul.f32 %v1192, 1.442695
    %v1194 = vpow.pop %v1193
    %v1195 = vadd.f32 %v1194, 1.0
    %v1196 = vrcp.pop %v1195
    %v1197 = vmul.f32 %v1195, %v1196
    %v1198 = vsub.f32 1.0, %v1197
    %v1199 = vmul.f32 %v1196, %v1198
    %v1200 = vadd.f32 %v1196, %v1199
    %vm1201 = vweird.f32 %v1195
    %vm1202 = vweird.f32 %v1196
    %vm1203 = vmor %vm1201, %vm1202
    %v1204 = vsel %vm1203, %v1196, %v1200
    %v1205 = vand.u32 2147483647, %v1195
    %vm1206 = vcmp.eq.f32.partialorder %v1205, 8.507059e+37
    %v1207 = vand.u32 %v1195, 2147483648
    %v1208 = vor.u32 1.1754944e-38, %v1207
    %v1209 = vsel %vm1206, %v1208, %v1204
    %v1210 = vmul.f32 1.0, %v1209
    %v1211 = vtanh.pop %v1157
    %v1212 = vxor.u32 %v1170, 2147483648
    %v1213 = vmul.f32 %v1212, 1.442695
    %v1214 = vpow.pop %v1213
    %v1215 = vadd.f32 %v1214, 1.0
    %v1216 = vrcp.pop %v1215
    %v1217 = vmul.f32 %v1215, %v1216
    %v1218 = vsub.f32 1.0, %v1217
    %v1219 = vmul.f32 %v1216, %v1218
    %v1220 = vadd.f32 %v1216, %v1219
    %vm1221 = vweird.f32 %v1215
    %vm1222 = vweird.f32 %v1216
    %vm1223 = vmor %vm1221, %vm1222
    %v1224 = vsel %vm1223, %v1216, %v1220
    %v1225 = vand.u32 2147483647, %v1215
    %vm1226 = vcmp.eq.f32.partialorder %v1225, 8.507059e+37
    %v1227 = vand.u32 %v1215, 2147483648
    %v1228 = vor.u32 1.1754944e-38, %v1227
    %v1229 = vsel %vm1226, %v1228, %v1224
    %v1230 = vmul.f32 1.0, %v1229
    %v1231 = vmul.f32 %v1210, %v1080
    %v1232 = vmul.f32 %v1191, %v1211
    %v1233 = vadd.f32 %v1231, %v1232
    %v1234 = vtanh.pop %v1233
    %v1235 = vmul.f32 %v1230, %v1234
    %1237 = vset.pattern.permute.xlu0 0
    %1238 = vperm.xlu0 %1237, %v72
    %v1239 = vpop.permute.xlu0 %1238
    %v1241 = vmul.f32 %v1239, %v126
    %v1242 = vmul.f32 %v1239, %v127
    %v1243 = vmul.f32 %v1239, %v128
    %v1244 = vmul.f32 %v1239, %v129
    %v1245 = vadd.f32 %v135, %v1241
    %v1246 = vadd.f32 %v136, %v1242
    %v1247 = vadd.f32 %v137, %v1243
    %v1248 = vadd.f32 %v138, %v1244
    %1249 = vset.pattern.permute.xlu0 1
    %1250 = vperm.xlu0 %1249, %v72
    %v1251 = vpop.permute.xlu0 %1250
    %v1253 = vmul.f32 %v1251, %v159
    %v1254 = vmul.f32 %v1251, %v160
    %v1255 = vmul.f32 %v1251, %v161
    %v1256 = vmul.f32 %v1251, %v162
    %v1257 = vadd.f32 %v1245, %v1253
    %v1258 = vadd.f32 %v1246, %v1254
    %v1259 = vadd.f32 %v1247, %v1255
    %v1260 = vadd.f32 %v1248, %v1256
    %1261 = vset.pattern.permute.xlu0 2
    %1262 = vperm.xlu0 %1261, %v72
    %v1263 = vpop.permute.xlu0 %1262
    %v1265 = vmul.f32 %v1263, %v183
    %v1266 = vmul.f32 %v1263, %v184
    %v1267 = vmul.f32 %v1263, %v185
    %v1268 = vmul.f32 %v1263, %v186
    %v1269 = vadd.f32 %v1257, %v1265
    %v1270 = vadd.f32 %v1258, %v1266
    %v1271 = vadd.f32 %v1259, %v1267
    %v1272 = vadd.f32 %v1260, %v1268
    %v1273 = vpack.c.bf16 %v1235, %v1235
    %1274 = vmatpush.bf16.msra.mxu0 %v320
    %1275 = vmatpush.bf16.msra.mxu0 %v316
    %1276 = vmatpush.bf16.msra.mxu0 %v312
    %1277 = vmatpush.bf16.msra.mxu0 %v308
    %1278 = vmatpush.bf16.msra.mxu0 %v304
    %1279 = vmatpush.bf16.msra.mxu0 %v300
    %1280 = vmatpush.bf16.msra.mxu0 %v296
    %1281 = vmatpush.bf16.msra.mxu0 %v292
    %1282 = vmatmul.bf16.gmra.mxu0 %v1273
    %v1283 = vpop.f32.mrf.mxu0
    %v1284 = vadd.f32 %v1269, %v1283
    %v1285 = vpop.f32.mrf.mxu0
    %1286 = vdwg.mxu0
    %1287 = vmatpush.bf16.msra.mxu0 %v321
    %1288 = vmatpush.bf16.msra.mxu0 %v317
    %1289 = vmatpush.bf16.msra.mxu0 %v313
    %1290 = vmatpush.bf16.msra.mxu0 %v309
    %1291 = vmatpush.bf16.msra.mxu0 %v305
    %1292 = vmatpush.bf16.msra.mxu0 %v301
    %1293 = vmatpush.bf16.msra.mxu0 %v297
    %1294 = vmatpush.bf16.msra.mxu0 %v293
    %1295 = vmatmul.bf16.gmra.mxu0 %v1273
    %v1296 = vpop.f32.mrf.mxu0
    %v1297 = vadd.f32 %v1270, %v1296
    %v1298 = vpop.f32.mrf.mxu0
    %1299 = vdwg.mxu0
    %1300 = vmatpush.bf16.msra.mxu0 %v322
    %1301 = vmatpush.bf16.msra.mxu0 %v318
    %1302 = vmatpush.bf16.msra.mxu0 %v314
    %1303 = vmatpush.bf16.msra.mxu0 %v310
    %1304 = vmatpush.bf16.msra.mxu0 %v306
    %1305 = vmatpush.bf16.msra.mxu0 %v302
    %1306 = vmatpush.bf16.msra.mxu0 %v298
    %1307 = vmatpush.bf16.msra.mxu0 %v294
    %1308 = vmatmul.bf16.gmra.mxu0 %v1273
    %v1309 = vpop.f32.mrf.mxu0
    %v1310 = vadd.f32 %v1271, %v1309
    %v1311 = vpop.f32.mrf.mxu0
    %1312 = vdwg.mxu0
    %1313 = vmatpush.bf16.msra.mxu0 %v323
    %1314 = vmatpush.bf16.msra.mxu0 %v319
    %1315 = vmatpush.bf16.msra.mxu0 %v315
    %1316 = vmatpush.bf16.msra.mxu0 %v311
    %1317 = vmatpush.bf16.msra.mxu0 %v307
    %1318 = vmatpush.bf16.msra.mxu0 %v303
    %1319 = vmatpush.bf16.msra.mxu0 %v299
    %1320 = vmatpush.bf16.msra.mxu0 %v295
    %1321 = vmatmul.bf16.gmra.mxu0 %v1273
    %v1322 = vpop.f32.mrf.mxu0
    %v1323 = vadd.f32 %v1272, %v1322
    %v1324 = vpop.f32.mrf.mxu0
    %1325 = vdwg.mxu0
    %v1326 = vxor.u32 %v1284, 2147483648
    %v1327 = vmul.f32 %v1326, 1.442695
    %v1328 = vpow.pop %v1327
    %v1329 = vadd.f32 %v1328, 1.0
    %v1330 = vrcp.pop %v1329
    %v1331 = vmul.f32 %v1329, %v1330
    %v1332 = vsub.f32 1.0, %v1331
    %v1333 = vmul.f32 %v1330, %v1332
    %v1334 = vadd.f32 %v1330, %v1333
    %vm1335 = vweird.f32 %v1329
    %vm1336 = vweird.f32 %v1330
    %vm1337 = vmor %vm1335, %vm1336
    %v1338 = vsel %vm1337, %v1330, %v1334
    %v1339 = vand.u32 2147483647, %v1329
    %vm1340 = vcmp.eq.f32.partialorder %v1339, 8.507059e+37
    %v1341 = vand.u32 %v1329, 2147483648
    %v1342 = vor.u32 1.1754944e-38, %v1341
    %v1343 = vsel %vm1340, %v1342, %v1338
    %v1344 = vmul.f32 1.0, %v1343
    %v1345 = vxor.u32 %v1297, 2147483648
    %v1346 = vmul.f32 %v1345, 1.442695
    %v1347 = vpow.pop %v1346
    %v1348 = vadd.f32 %v1347, 1.0
    %v1349 = vrcp.pop %v1348
    %v1350 = vmul.f32 %v1348, %v1349
    %v1351 = vsub.f32 1.0, %v1350
    %v1352 = vmul.f32 %v1349, %v1351
    %v1353 = vadd.f32 %v1349, %v1352
    %vm1354 = vweird.f32 %v1348
    %vm1355 = vweird.f32 %v1349
    %vm1356 = vmor %vm1354, %vm1355
    %v1357 = vsel %vm1356, %v1349, %v1353
    %v1358 = vand.u32 2147483647, %v1348
    %vm1359 = vcmp.eq.f32.partialorder %v1358, 8.507059e+37
    %v1360 = vand.u32 %v1348, 2147483648
    %v1361 = vor.u32 1.1754944e-38, %v1360
    %v1362 = vsel %vm1359, %v1361, %v1357
    %v1363 = vmul.f32 1.0, %v1362
    %v1364 = vtanh.pop %v1310
    %v1365 = vxor.u32 %v1323, 2147483648
    %v1366 = vmul.f32 %v1365, 1.442695
    %v1367 = vpow.pop %v1366
    %v1368 = vadd.f32 %v1367, 1.0
    %v1369 = vrcp.pop %v1368
    %v1370 = vmul.f32 %v1368, %v1369
    %v1371 = vsub.f32 1.0, %v1370
    %v1372 = vmul.f32 %v1369, %v1371
    %v1373 = vadd.f32 %v1369, %v1372
    %vm1374 = vweird.f32 %v1368
    %vm1375 = vweird.f32 %v1369
    %vm1376 = vmor %vm1374, %vm1375
    %v1377 = vsel %vm1376, %v1369, %v1373
    %v1378 = vand.u32 2147483647, %v1368
    %vm1379 = vcmp.eq.f32.partialorder %v1378, 8.507059e+37
    %v1380 = vand.u32 %v1368, 2147483648
    %v1381 = vor.u32 1.1754944e-38, %v1380
    %v1382 = vsel %vm1379, %v1381, %v1377
    %v1383 = vmul.f32 1.0, %v1382
    %v1384 = vmul.f32 %v1363, %v1233
    %v1385 = vmul.f32 %v1344, %v1364
    %v1386 = vadd.f32 %v1384, %v1385
    %v1387 = vtanh.pop %v1386
    %v1388 = vmul.f32 %v1383, %v1387
    %1390 = vset.pattern.permute.xlu0 0
    %1391 = vperm.xlu0 %1390, %v73
    %v1392 = vpop.permute.xlu0 %1391
    %v1394 = vmul.f32 %v1392, %v126
    %v1395 = vmul.f32 %v1392, %v127
    %v1396 = vmul.f32 %v1392, %v128
    %v1397 = vmul.f32 %v1392, %v129
    %v1398 = vadd.f32 %v135, %v1394
    %v1399 = vadd.f32 %v136, %v1395
    %v1400 = vadd.f32 %v137, %v1396
    %v1401 = vadd.f32 %v138, %v1397
    %1402 = vset.pattern.permute.xlu0 1
    %1403 = vperm.xlu0 %1402, %v73
    %v1404 = vpop.permute.xlu0 %1403
    %v1406 = vmul.f32 %v1404, %v159
    %v1407 = vmul.f32 %v1404, %v160
    %v1408 = vmul.f32 %v1404, %v161
    %v1409 = vmul.f32 %v1404, %v162
    %v1410 = vadd.f32 %v1398, %v1406
    %v1411 = vadd.f32 %v1399, %v1407
    %v1412 = vadd.f32 %v1400, %v1408
    %v1413 = vadd.f32 %v1401, %v1409
    %1414 = vset.pattern.permute.xlu0 2
    %1415 = vperm.xlu0 %1414, %v73
    %v1416 = vpop.permute.xlu0 %1415
    %v1418 = vmul.f32 %v1416, %v183
    %v1419 = vmul.f32 %v1416, %v184
    %v1420 = vmul.f32 %v1416, %v185
    %v1421 = vmul.f32 %v1416, %v186
    %v1422 = vadd.f32 %v1410, %v1418
    %v1423 = vadd.f32 %v1411, %v1419
    %v1424 = vadd.f32 %v1412, %v1420
    %v1425 = vadd.f32 %v1413, %v1421
    %v1426 = vpack.c.bf16 %v1388, %v1388
    %1427 = vmatpush.bf16.msra.mxu0 %v320
    %1428 = vmatpush.bf16.msra.mxu0 %v316
    %1429 = vmatpush.bf16.msra.mxu0 %v312
    %1430 = vmatpush.bf16.msra.mxu0 %v308
    %1431 = vmatpush.bf16.msra.mxu0 %v304
    %1432 = vmatpush.bf16.msra.mxu0 %v300
    %1433 = vmatpush.bf16.msra.mxu0 %v296
    %1434 = vmatpush.bf16.msra.mxu0 %v292
    %1435 = vmatmul.bf16.gmra.mxu0 %v1426
    %v1436 = vpop.f32.mrf.mxu0
    %v1437 = vadd.f32 %v1422, %v1436
    %v1438 = vpop.f32.mrf.mxu0
    %1439 = vdwg.mxu0
    %1440 = vmatpush.bf16.msra.mxu0 %v321
    %1441 = vmatpush.bf16.msra.mxu0 %v317
    %1442 = vmatpush.bf16.msra.mxu0 %v313
    %1443 = vmatpush.bf16.msra.mxu0 %v309
    %1444 = vmatpush.bf16.msra.mxu0 %v305
    %1445 = vmatpush.bf16.msra.mxu0 %v301
    %1446 = vmatpush.bf16.msra.mxu0 %v297
    %1447 = vmatpush.bf16.msra.mxu0 %v293
    %1448 = vmatmul.bf16.gmra.mxu0 %v1426
    %v1449 = vpop.f32.mrf.mxu0
    %v1450 = vadd.f32 %v1423, %v1449
    %v1451 = vpop.f32.mrf.mxu0
    %1452 = vdwg.mxu0
    %1453 = vmatpush.bf16.msra.mxu0 %v322
    %1454 = vmatpush.bf16.msra.mxu0 %v318
    %1455 = vmatpush.bf16.msra.mxu0 %v314
    %1456 = vmatpush.bf16.msra.mxu0 %v310
    %1457 = vmatpush.bf16.msra.mxu0 %v306
    %1458 = vmatpush.bf16.msra.mxu0 %v302
    %1459 = vmatpush.bf16.msra.mxu0 %v298
    %1460 = vmatpush.bf16.msra.mxu0 %v294
    %1461 = vmatmul.bf16.gmra.mxu0 %v1426
    %v1462 = vpop.f32.mrf.mxu0
    %v1463 = vadd.f32 %v1424, %v1462
    %v1464 = vpop.f32.mrf.mxu0
    %1465 = vdwg.mxu0
    %1466 = vmatpush.bf16.msra.mxu0 %v323
    %1467 = vmatpush.bf16.msra.mxu0 %v319
    %1468 = vmatpush.bf16.msra.mxu0 %v315
    %1469 = vmatpush.bf16.msra.mxu0 %v311
    %1470 = vmatpush.bf16.msra.mxu0 %v307
    %1471 = vmatpush.bf16.msra.mxu0 %v303
    %1472 = vmatpush.bf16.msra.mxu0 %v299
    %1473 = vmatpush.bf16.msra.mxu0 %v295
    %1474 = vmatmul.bf16.gmra.mxu0 %v1426
    %v1475 = vpop.f32.mrf.mxu0
    %v1476 = vadd.f32 %v1425, %v1475
    %v1477 = vpop.f32.mrf.mxu0
    %1478 = vdwg.mxu0
    %v1479 = vxor.u32 %v1437, 2147483648
    %v1480 = vmul.f32 %v1479, 1.442695
    %v1481 = vpow.pop %v1480
    %v1482 = vadd.f32 %v1481, 1.0
    %v1483 = vrcp.pop %v1482
    %v1484 = vmul.f32 %v1482, %v1483
    %v1485 = vsub.f32 1.0, %v1484
    %v1486 = vmul.f32 %v1483, %v1485
    %v1487 = vadd.f32 %v1483, %v1486
    %vm1488 = vweird.f32 %v1482
    %vm1489 = vweird.f32 %v1483
    %vm1490 = vmor %vm1488, %vm1489
    %v1491 = vsel %vm1490, %v1483, %v1487
    %v1492 = vand.u32 2147483647, %v1482
    %vm1493 = vcmp.eq.f32.partialorder %v1492, 8.507059e+37
    %v1494 = vand.u32 %v1482, 2147483648
    %v1495 = vor.u32 1.1754944e-38, %v1494
    %v1496 = vsel %vm1493, %v1495, %v1491
    %v1497 = vmul.f32 1.0, %v1496
    %v1498 = vxor.u32 %v1450, 2147483648
    %v1499 = vmul.f32 %v1498, 1.442695
    %v1500 = vpow.pop %v1499
    %v1501 = vadd.f32 %v1500, 1.0
    %v1502 = vrcp.pop %v1501
    %v1503 = vmul.f32 %v1501, %v1502
    %v1504 = vsub.f32 1.0, %v1503
    %v1505 = vmul.f32 %v1502, %v1504
    %v1506 = vadd.f32 %v1502, %v1505
    %vm1507 = vweird.f32 %v1501
    %vm1508 = vweird.f32 %v1502
    %vm1509 = vmor %vm1507, %vm1508
    %v1510 = vsel %vm1509, %v1502, %v1506
    %v1511 = vand.u32 2147483647, %v1501
    %vm1512 = vcmp.eq.f32.partialorder %v1511, 8.507059e+37
    %v1513 = vand.u32 %v1501, 2147483648
    %v1514 = vor.u32 1.1754944e-38, %v1513
    %v1515 = vsel %vm1512, %v1514, %v1510
    %v1516 = vmul.f32 1.0, %v1515
    %v1517 = vtanh.pop %v1463
    %v1518 = vxor.u32 %v1476, 2147483648
    %v1519 = vmul.f32 %v1518, 1.442695
    %v1520 = vpow.pop %v1519
    %v1521 = vadd.f32 %v1520, 1.0
    %v1522 = vrcp.pop %v1521
    %v1523 = vmul.f32 %v1521, %v1522
    %v1524 = vsub.f32 1.0, %v1523
    %v1525 = vmul.f32 %v1522, %v1524
    %v1526 = vadd.f32 %v1522, %v1525
    %vm1527 = vweird.f32 %v1521
    %vm1528 = vweird.f32 %v1522
    %vm1529 = vmor %vm1527, %vm1528
    %v1530 = vsel %vm1529, %v1522, %v1526
    %v1531 = vand.u32 2147483647, %v1521
    %vm1532 = vcmp.eq.f32.partialorder %v1531, 8.507059e+37
    %v1533 = vand.u32 %v1521, 2147483648
    %v1534 = vor.u32 1.1754944e-38, %v1533
    %v1535 = vsel %vm1532, %v1534, %v1530
    %v1536 = vmul.f32 1.0, %v1535
    %v1537 = vmul.f32 %v1516, %v1386
    %v1538 = vmul.f32 %v1497, %v1517
    %v1539 = vadd.f32 %v1537, %v1538
    %v1540 = vtanh.pop %v1539
    %v1541 = vmul.f32 %v1536, %v1540
    %1542 = vst [vmem:[#allocation8] sm:$0x3] %v1541
    %1543 = vst [vmem:[#allocation10] sm:$0x3] %v1539
    %v1545 = vrot.slane %v623, 6
    %v1548 = vrot.slane %v776, 4
    %v1551 = vrot.slane %v929, 2
    %v1554 = vrot.slane %v1235, 6
    %v1557 = vrot.slane %v1388, 4
    %v1560 = vrot.slane %v1541, 2
    %vm1562 = vcmask 1041408
    %v1563 = vsel %vm1562, %v470, %v1545
    %vm1564 = vcmask 1043456
    %v1565 = vsel %vm1564, %v1563, %v1548
    %vm1566 = vcmask 1045504
    %v1567 = vsel %vm1566, %v1565, %v1551
    %v1568 = vsel %vm1562, %v1082, %v1554
    %v1569 = vsel %vm1564, %v1568, %v1557
    %v1570 = vsel %vm1566, %v1569, %v1560
    %v1571 = vpack.c.bf16 %v1570, %v1567
    %v1572 = vld [vmem:[#allocation5] sm:$0xf]
    %v1573 = vld [vmem:[#allocation5 + $0x4] sm:$0xf]
    %v1574 = vld [vmem:[#allocation5 + $0x8] sm:$0xf]
    %v1575 = vld [vmem:[#allocation5 + $0xc] sm:$0xf]
    %v1576 = vld [vmem:[#allocation5 + $0x10] sm:$0xf]
    %v1577 = vld [vmem:[#allocation5 + $0x14] sm:$0xf]
    %v1578 = vld [vmem:[#allocation5 + $0x18] sm:$0xf]
    %v1579 = vld [vmem:[#allocation5 + $0x1c] sm:$0xf]
    %v1580 = vld [vmem:[#allocation5 + $0x20] sm:$0xf]
    %v1581 = vld [vmem:[#allocation5 + $0x24] sm:$0xf]
    %v1582 = vld [vmem:[#allocation5 + $0x28] sm:$0xf]
    %v1583 = vld [vmem:[#allocation5 + $0x2c] sm:$0xf]
    %v1584 = vld [vmem:[#allocation5 + $0x30] sm:$0xf]
    %v1585 = vld [vmem:[#allocation5 + $0x34] sm:$0xf]
    %v1586 = vld [vmem:[#allocation5 + $0x38] sm:$0xf]
    %v1587 = vld [vmem:[#allocation5 + $0x3c] sm:$0xf]
    %v1588 = vld [vmem:[%s5] sm:$0x1]
    %v1590 = vperm.slane %v1588, 0
    %v1608 = vunpack.c.l.b16 %v1572
    %v1609 = vunpack.c.l.b16 %v1573
    %v1610 = vunpack.c.l.b16 %v1574
    %v1611 = vunpack.c.l.b16 %v1575
    %v1612 = vunpack.c.l.b16 %v1576
    %v1613 = vunpack.c.l.b16 %v1577
    %v1614 = vunpack.c.l.b16 %v1578
    %v1615 = vunpack.c.l.b16 %v1579
    %v1616 = vunpack.c.l.b16 %v1580
    %v1617 = vunpack.c.l.b16 %v1581
    %v1618 = vunpack.c.l.b16 %v1582
    %v1619 = vunpack.c.l.b16 %v1583
    %v1620 = vunpack.c.l.b16 %v1584
    %v1621 = vunpack.c.l.b16 %v1585
    %v1622 = vunpack.c.l.b16 %v1586
    %v1623 = vunpack.c.l.b16 %v1587
    %v1624 = vpack.c.b16 %v1609, %v1608
    %v1625 = vpack.c.b16 %v1611, %v1610
    %v1626 = vpack.c.b16 %v1613, %v1612
    %v1627 = vpack.c.b16 %v1615, %v1614
    %v1628 = vpack.c.b16 %v1617, %v1616
    %v1629 = vpack.c.b16 %v1619, %v1618
    %v1630 = vpack.c.b16 %v1621, %v1620
    %v1631 = vpack.c.b16 %v1623, %v1622
    %1640 = vmatpush.bf16.msra.mxu0 %v1631
    %1641 = vmatpush.bf16.msra.mxu0 %v1630
    %1642 = vmatpush.bf16.msra.mxu0 %v1629
    %1643 = vmatpush.bf16.msra.mxu0 %v1628
    %1644 = vmatpush.bf16.msra.mxu0 %v1627
    %1645 = vmatpush.bf16.msra.mxu0 %v1626
    %1646 = vmatpush.bf16.msra.mxu0 %v1625
    %1647 = vmatpush.bf16.msra.mxu0 %v1624
    %1648 = vmatmul.bf16.gmra.mxu0 %v1571
    %v1649 = vpop.f32.mrf.mxu0
    %v1650 = vadd.f32 %v1590, %v1649
    %v1651 = vpop.f32.mrf.mxu0
    %v1652 = vadd.f32 %v1590, %v1651
    %1653 = vdwg.mxu0
    %v1654 = vlaneseq
    %v1655 = vand.u32 %v1654, 127
    %vm1656 = vcmp.eq.s32.totalorder %v1655, 0
    %vm1657 = vcmp.ge.s32.totalorder %v1655, 1
    %vm1658 = vcmp.lt.s32.totalorder %v1655, 21
    %vm1659 = vmand %vm1657, %vm1658
    %vm1660 = vcmp.ge.s32.totalorder %v1655, 61
    %vm1661 = vcmp.lt.s32.totalorder %v1655, 101
    %vm1662 = vmand %vm1660, %vm1661
    %vm1663 = vcmp.ge.s32.totalorder %v1655, 101
    %v1664 = vsel %vm1659, %v1650, -1e+30
    %v1665 = vsel %vm1659, %v1652, -1e+30
    %1666 = vmax.xlane.f32.xlu0 %v1664
    %v1667 = vpop.xlane.xlu0 %1666
    %1668 = vmax.xlane.f32.xlu0 %v1665
    %v1669 = vpop.xlane.xlu0 %1668
    %v1670 = vsub.f32 %v1664, %v1667
    %v1671 = vsub.f32 %v1665, %v1669
    %v1672 = vmul.f32 %v1670, 1.442695
    %v1673 = vpow.pop %v1672
    %v1674 = vmul.f32 %v1671, 1.442695
    %v1675 = vpow.pop %v1674
    %1676 = vadd.xlane.f32.xlu0 %v1673
    %v1677 = vpop.xlane.xlu0 %1676
    %1678 = vadd.xlane.f32.xlu0 %v1675
    %v1679 = vpop.xlane.xlu0 %1678
    %v1680 = vrcp.pop %v1677
    %v1681 = vrcp.pop %v1679
    %v1682 = vmul.f32 %v1673, %v1680
    %v1683 = vmul.f32 %v1675, %v1681
    %v1684 = vxor.u32 %v1650, 2147483648
    %v1685 = vxor.u32 %v1652, 2147483648
    %v1686 = vmul.f32 %v1684, 1.442695
    %v1687 = vpow.pop %v1686
    %v1688 = vmul.f32 %v1685, 1.442695
    %v1689 = vpow.pop %v1688
    %v1690 = vadd.f32 %v1687, 1.0
    %v1691 = vadd.f32 %v1689, 1.0
    %v1692 = vrcp.pop %v1690
    %v1693 = vmul.f32 %v1690, %v1692
    %v1694 = vsub.f32 1.0, %v1693
    %v1695 = vmul.f32 %v1692, %v1694
    %v1696 = vadd.f32 %v1692, %v1695
    %vm1697 = vweird.f32 %v1690
    %vm1698 = vweird.f32 %v1692
    %vm1699 = vmor %vm1697, %vm1698
    %v1700 = vsel %vm1699, %v1692, %v1696
    %v1701 = vand.u32 2147483647, %v1690
    %vm1702 = vcmp.eq.f32.partialorder %v1701, 8.507059e+37
    %v1703 = vand.u32 %v1690, 2147483648
    %v1704 = vor.u32 1.1754944e-38, %v1703
    %v1705 = vsel %vm1702, %v1704, %v1700
    %v1706 = vmul.f32 1.0, %v1705
    %v1707 = vrcp.pop %v1691
    %v1708 = vmul.f32 %v1691, %v1707
    %v1709 = vsub.f32 1.0, %v1708
    %v1710 = vmul.f32 %v1707, %v1709
    %v1711 = vadd.f32 %v1707, %v1710
    %vm1712 = vweird.f32 %v1691
    %vm1713 = vweird.f32 %v1707
    %vm1714 = vmor %vm1712, %vm1713
    %v1715 = vsel %vm1714, %v1707, %v1711
    %v1716 = vand.u32 2147483647, %v1691
    %vm1717 = vcmp.eq.f32.partialorder %v1716, 8.507059e+37
    %v1718 = vand.u32 %v1691, 2147483648
    %v1719 = vor.u32 1.1754944e-38, %v1718
    %v1720 = vsel %vm1717, %v1719, %v1715
    %v1721 = vmul.f32 1.0, %v1720
    %v1722 = vsel %vm1656, %v1706, %v1650
    %v1723 = vsel %vm1656, %v1721, %v1652
    %v1724 = vsel %vm1659, %v1682, %v1722
    %v1725 = vsel %vm1659, %v1683, %v1723
    %v1726 = vmul.f32 %v1650, 1.442695
    %v1727 = vpow.pop %v1726
    %v1728 = vmul.f32 %v1652, 1.442695
    %v1729 = vpow.pop %v1728
    %v1730 = vsel %vm1662, %v1727, %v1724
    %v1731 = vsel %vm1662, %v1729, %v1725
    %v1732 = vtanh.pop %v1650
    %v1733 = vtanh.pop %v1652
    %v1734 = vsel %vm1663, %v1732, %v1730
    %v1735 = vsel %vm1663, %v1733, %v1731
    %1736 = vst [vmem:[#allocation7] sm:$0xff] %v1734
    %1737 = vst [vmem:[#allocation7 + $0x8] sm:$0xff] %v1735
    // Predicated region
    $region42: #{tpu_custom_call.1} parent=1 // pred_check
      _
    $region43: #{tpu_custom_call.1} parent=1 // pred_check_branch
      %1739 = sbr.rel (0) target = $region45
    $region44: #{tpu_custom_call.1} parent=1 // pred_region
      %1741 = vsyncadd [#allocation4], 0
      %s1742 = sshll.u32 [#allocation7], 4
      %s1743 = int_to_ptr.vmem [resolvable:$true] %s1742
      %s1744 = sshll.u32 %s8, 4
      %s1745 = int_to_ptr.hbm [resolvable:$true] %s1744
      %1750 = dma.vmem_to_hbm [thread:$0]  %s1743, 256, %s1745, [#allocation4], 128, 128, 8
    $region45: #{tpu_custom_call.1} parent=1 // pred_fallthru
      _
    // Predicated region
    $region46: #{tpu_custom_call.1} parent=1 // pred_check
      _
    $region47: #{tpu_custom_call.1} parent=1 // pred_check_branch
      %1752 = sbr.rel (0) target = $region49
    $region48: #{tpu_custom_call.1} parent=1 // pred_region
      %1754 = vsyncadd [#allocation9], 0
      %s1756 = sshll.u32 [#allocation8], 4
      %s1757 = int_to_ptr.vmem [resolvable:$true] %s1756
      %s1758 = sshll.u32 %s9, 4
      %s1759 = int_to_ptr.hbm [resolvable:$true] %s1758
      %1761 = dma.vmem_to_hbm [thread:$0]  %s1757, 32, %s1759, [#allocation9]
    $region49: #{tpu_custom_call.1} parent=1 // pred_fallthru
      _
    // Predicated region
    $region50: #{tpu_custom_call.1} parent=1 // pred_check
      _
    $region51: #{tpu_custom_call.1} parent=1 // pred_check_branch
      %1763 = sbr.rel (0) target = $region53
    $region52: #{tpu_custom_call.1} parent=1 // pred_region
      %1765 = vsyncadd [#allocation9], 0
      %s1767 = sshll.u32 [#allocation10], 4
      %s1768 = int_to_ptr.vmem [resolvable:$true] %s1767
      %s1769 = sshll.u32 %s10, 4
      %s1770 = int_to_ptr.hbm [resolvable:$true] %s1769
      %1772 = dma.vmem_to_hbm [thread:$0]  %s1768, 32, %s1770, [#allocation9]
    $region53: #{tpu_custom_call.1} parent=1 // pred_fallthru
      _
    // Predicated region
    $region54: #{tpu_custom_call.1} parent=1 // pred_check
      _
    $region55: #{tpu_custom_call.1} parent=1 // pred_check_branch
      %1774 = sbr.rel (0) target = $region57
    $region56: #{tpu_custom_call.1} parent=1 // pred_region
      %1776 = dma.done [#allocation4], 256
    $region57: #{tpu_custom_call.1} parent=1 // pred_fallthru
      _
    // Predicated region
    $region58: #{tpu_custom_call.1} parent=1 // pred_check
      _
    $region59: #{tpu_custom_call.1} parent=1 // pred_check_branch
      %1778 = sbr.rel (0) target = $region61
    $region60: #{tpu_custom_call.1} parent=1 // pred_region
      %1780 = dma.done [#allocation9], 32
    $region61: #{tpu_custom_call.1} parent=1 // pred_fallthru
      _
    // Predicated region
    $region62: #{tpu_custom_call.1} parent=1 // pred_check
      _
    $region63: #{tpu_custom_call.1} parent=1 // pred_check_branch
      %1782 = sbr.rel (0) target = $region65
    $region64: #{tpu_custom_call.1} parent=1 // pred_region
      %1784 = dma.done [#allocation9], 32
    $region65: #{tpu_custom_call.1} parent=1 // pred_fallthru
      _
    %1785 = vsyncpa [#allocation3], 1
    %1786 = vsyncpa [#allocation6], 1
    %1787 = vsyncpa [#allocation4], 1
    %1788 = vsyncpa [#allocation9], 1

</llo_original>
